<compile_context>
chip_gen: v5e
topology: v5e:2x2
jax: 0.10.0
libtpu: 0.0.40
codegen_flags: <defaults>
</compile_context>

<pallas_src>
import functools

import jax
import jax.numpy as jnp
import numpy as np
from jax.experimental import pallas as pl
from jax.experimental.pallas import tpu as pltpu

EPS = 1e-5


# ----------------------------------------------------------------------------- kernel
def _bc_block_kernel(x_ref, w1_ref, b1_ref, w2_ref, b2_ref, mask_ref, *rest,
                     H, W, has_proj):
    """Fused BCResNetBlock for one batch element, channel-major flat-spatial layout."""
    if has_proj:
        ws_ref, bs_ref, out_ref, hpad_ref = rest
    else:
        out_ref, hpad_ref = rest

    Wp = W + 2                 # padded width
    HWp = H * Wp               # flat "over-computed" output length (pad cols kept)
    c0 = Wp + 1                # flat offset of padded position (1, 1) == centre tap

    x = x_ref[0]               # (Cin, L) bf16, L = (H+2)*(W+2) + 2

    # ---- conv1 (BN1 scale folded into w1) as 9 shifted matmuls on the MXU ----
    acc = jnp.zeros(out_ref.shape[1:], jnp.float32)            # (Cout, HWp)
    for k in range(9):
        off = (k // 3) * Wp + (k % 3)
        acc = acc + jnp.dot(w1_ref[k], x[:, off:off + HWp],
                            preferred_element_type=jnp.float32)
    h = jnp.maximum(acc + b1_ref[...], 0.0)                    # + BN1 bias, ReLU (f32)
    h = h * mask_ref[...]                                      # zero wrap/pad columns

    # ---- stage zero-padded h (flat layout) in VMEM for conv2's shifted reads ----
    hpad_ref[...] = jnp.zeros_like(hpad_ref)
    hpad_ref[:, c0:c0 + HWp] = h.astype(hpad_ref.dtype)        # bf16 for the MXU
    hp = hpad_ref[...]

    # ---- conv2 (BN2 scale folded into w2) ----
    acc = jnp.zeros(out_ref.shape[1:], jnp.float32)
    for k in range(9):
        off = (k // 3) * Wp + (k % 3)
        acc = acc + jnp.dot(w2_ref[k], hp[:, off:off + HWp],
                            preferred_element_type=jnp.float32)
    out = acc + b2_ref[...]

    # ---- shortcut (1x1 conv + BN, or identity) + final ReLU, all fused ----
    xc = x[:, c0:c0 + HWp]                                     # centre tap == x itself
    if has_proj:
        out = out + jnp.dot(ws_ref[...], xc,
                            preferred_element_type=jnp.float32) + bs_ref[...]
    else:
        out = out + xc.astype(jnp.float32)
    out_ref[0] = jnp.maximum(out, 0.0).astype(out_ref.dtype)   # lane-dense store


# ----------------------------------------------------------------------------- glue
def fold_bn(gamma, beta, mean, var, conv_bias):
    """Fold inference-mode BatchNorm (+ conv bias) into per-channel scale/bias."""
    scale = gamma / jnp.sqrt(var + EPS)
    bias = beta + (conv_bias - mean) * scale
    return scale, bias


def bc_resnet_block(x_nchw, p, stride=1):
    """Forward pass of BCResNetBlock.  Input/output: NCHW, float32."""
    if stride != 1:
        # TODO(synk): strided conv1 / strided 1x1 shortcut not implemented (stride=1 only).
        raise NotImplementedError("stride != 1 not implemented")

    N, Cin, H, W = x_nchw.shape
    Cout = p["conv1_w"].shape[0]
    Hp, Wp = H + 2, W + 2
    HWp = H * Wp                       # over-computed flat output length
    L = Hp * Wp + 2                    # flat padded length (+2 keeps every tap window in-bounds)
    has_proj = (stride != 1) or (Cin != Cout)

    # input: zero-pad spatially, flatten space, bf16 for the MXU (stays NCHW-major)
    xp = jnp.pad(x_nchw, ((0, 0), (0, 0), (1, 1), (1, 1))).reshape(N, Cin, Hp * Wp)
    xp = jnp.pad(xp, ((0, 0), (0, 0), (0, 2))).astype(jnp.bfloat16)          # (N, Cin, L)

    # fold BN into weights (scale) and bias; weights as (tap, Cout, Cin), bf16
    s1, b1 = fold_bn(p["bn1_gamma"], p["bn1_beta"], p["bn1_mean"], p["bn1_var"], p["conv1_b"])
    w1 = jnp.transpose(p["conv1_w"] * s1[:, None, None, None], (2, 3, 0, 1))
    w1 = w1.reshape(9, Cout, Cin).astype(jnp.bfloat16)
    s2, b2 = fold_bn(p["bn2_gamma"], p["bn2_beta"], p["bn2_mean"], p["bn2_var"], p["conv2_b"])
    w2 = jnp.transpose(p["conv2_w"] * s2[:, None, None, None], (2, 3, 0, 1))
    w2 = w2.reshape(9, Cout, Cout).astype(jnp.bfloat16)

    # mask that zeroes the flat-conv columns falling on padding (needed before conv2)
    mask = (jnp.arange(HWp) % Wp < W).astype(jnp.float32).reshape(1, HWp)

    args = [xp, w1, b1.reshape(Cout, 1).astype(jnp.float32),
            w2, b2.reshape(Cout, 1).astype(jnp.float32), mask]
    in_specs = [
        pl.BlockSpec((1, Cin, L), lambda n: (n, 0, 0)),
        pl.BlockSpec((9, Cout, Cin), lambda n: (0, 0, 0)),
        pl.BlockSpec((Cout, 1), lambda n: (0, 0)),
        pl.BlockSpec((9, Cout, Cout), lambda n: (0, 0, 0)),
        pl.BlockSpec((Cout, 1), lambda n: (0, 0)),
        pl.BlockSpec((1, HWp), lambda n: (0, 0)),
    ]
    if has_proj:
        ss, bs = fold_bn(p["sc_bn_gamma"], p["sc_bn_beta"], p["sc_bn_mean"],
                         p["sc_bn_var"], p["sc_b"])
        ws = (p["sc_w"][:, :, 0, 0] * ss[:, None]).astype(jnp.bfloat16)       # (Cout, Cin)
        args += [ws, bs.reshape(Cout, 1).astype(jnp.float32)]
        in_specs += [pl.BlockSpec((Cout, Cin), lambda n: (0, 0)),
                     pl.BlockSpec((Cout, 1), lambda n: (0, 0))]

    kernel = functools.partial(_bc_block_kernel, H=H, W=W, has_proj=has_proj)
    out_flat = pl.pallas_call(
        kernel,
        out_shape=jax.ShapeDtypeStruct((N, Cout, HWp), jnp.float32),
        grid=(N,),
        in_specs=in_specs,
        out_specs=pl.BlockSpec((1, Cout, HWp), lambda n: (n, 0, 0)),
        scratch_shapes=[pltpu.VMEM((Cout, L), jnp.bfloat16)],     # padded h, stays in VMEM
        compiler_params=pltpu.CompilerParams(
            dimension_semantics=("parallel",),                    # batch across TCs (v7x)
            vmem_limit_bytes=32 * 1024 * 1024),
    )(*args)

    # drop the padding columns; result is already channel-major == NCHW
    return out_flat.reshape(N, Cout, H, Wp)[:, :, :, :W]


# ----------------------------------------------------------------------------- params & reference
def init_params(key, cin, cout):
    ks = iter(jax.random.split(key, 24))

    def nrm(shape, scale=0.1):
        return (scale * jax.random.normal(next(ks), shape)).astype(jnp.float32)

    return {
        "conv1_w": nrm((cout, cin, 3, 3)), "conv1_b": nrm((cout,)),
        "bn1_gamma": 1.0 + nrm((cout,)), "bn1_beta": nrm((cout,)),
        "bn1_mean": nrm((cout,)), "bn1_var": jnp.abs(nrm((cout,), 0.3)) + 0.5,
        "conv2_w": nrm((cout, cout, 3, 3)), "conv2_b": nrm((cout,)),
        "bn2_gamma": 1.0 + nrm((cout,)), "bn2_beta": nrm((cout,)),
        "bn2_mean": nrm((cout,)), "bn2_var": jnp.abs(nrm((cout,), 0.3)) + 0.5,
        "sc_w": nrm((cout, cin, 1, 1)), "sc_b": nrm((cout,)),
        "sc_bn_gamma": 1.0 + nrm((cout,)), "sc_bn_beta": nrm((cout,)),
        "sc_bn_mean": nrm((cout,)), "sc_bn_var": jnp.abs(nrm((cout,), 0.3)) + 0.5,
    }


def _ref_block(x_nchw, p, stride=1):
    """Plain-JAX (XLA conv, f32) reference; same inference-mode BN semantics."""
    def conv(x, w, b, s, pad):
        y = jax.lax.conv_general_dilated(x, w, (s, s), [(pad, pad), (pad, pad)],
                                         dimension_numbers=("NCHW", "OIHW", "NCHW"))
        return y + b.reshape(1, -1, 1, 1)

    def bn(x, g, bt, m, v):
        r = lambda t: t.reshape(1, -1, 1, 1)
        return (x - r(m)) / jnp.sqrt(r(v) + EPS) * r(g) + r(bt)

    cin = x_nchw.shape[1]
    cout = p["conv1_w"].shape[0]
    out = jax.nn.relu(bn(conv(x_nchw, p["conv1_w"], p["conv1_b"], stride, 1),
                         p["bn1_gamma"], p["bn1_beta"], p["bn1_mean"], p["bn1_var"]))
    out = bn(conv(out, p["conv2_w"], p["conv2_b"], 1, 1),
             p["bn2_gamma"], p["bn2_beta"], p["bn2_mean"], p["bn2_var"])
    if stride != 1 or cin != cout:
        sc = bn(conv(x_nchw, p["sc_w"], p["sc_b"], stride, 0),
                p["sc_bn_gamma"], p["sc_bn_beta"], p["sc_bn_mean"], p["sc_bn_var"])
    else:
        sc = x_nchw
    return jax.nn.relu(out + sc)


# ----------------------------------------------------------------------------- main
if __name__ == "__main__":
    key = jax.random.PRNGKey(0)
    kx1, kp1, kx2, kp2 = jax.random.split(key, 4)

    N, Cin, H, W, Cout = 2, 4, 16, 16, 8

    # Tolerances account for bf16 MXU operands (f32 accumulation) vs the f32 reference.
    RTOL = ATOL = 5e-2

    # case 1: Cin != Cout -> exercises the fused 1x1-conv+BN projection shortcut
    x = jax.random.normal(kx1, (N, Cin, H, W), jnp.float32)
    params = init_params(kp1, Cin, Cout)
    out = jax.block_until_ready(bc_resnet_block(x, params))
    ref = jax.block_until_ready(_ref_block(x, params))
    assert out.shape == (N, Cout, H, W)
    np.testing.assert_allclose(np.asarray(out), np.asarray(ref), rtol=RTOL, atol=ATOL)

    # case 2: Cin == Cout -> identity shortcut path
    x2 = jax.random.normal(kx2, (N, Cout, H, W), jnp.float32)
    params2 = init_params(kp2, Cout, Cout)
    out2 = jax.block_until_ready(bc_resnet_block(x2, params2))
    ref2 = jax.block_until_ready(_ref_block(x2, params2))
    np.testing.assert_allclose(np.asarray(out2), np.asarray(ref2), rtol=RTOL, atol=ATOL)

    print("KERNEL_OK")
</pallas_src>

<mosaic_0001>
module attributes {stable_mosaic.version = 11 : i64} {
  func.func @_bc_block_kernel(%arg0: i32, %arg1: memref<1x4x326xbf16, #tpu.memory_space<vmem>>, %arg2: memref<9x8x4xbf16, #tpu.memory_space<vmem>>, %arg3: memref<8x1xf32, #tpu.memory_space<vmem>>, %arg4: memref<9x8x8xbf16, #tpu.memory_space<vmem>>, %arg5: memref<8x1xf32, #tpu.memory_space<vmem>>, %arg6: memref<1x288xf32, #tpu.memory_space<vmem>>, %arg7: memref<8x4xbf16, #tpu.memory_space<vmem>>, %arg8: memref<8x1xf32, #tpu.memory_space<vmem>>, %arg9: memref<1x8x288xf32, #tpu.memory_space<vmem>>, %arg10: memref<8x326xbf16, #tpu.memory_space<vmem>>) attributes {dimension_semantics = [#tpu.dimension_semantics<parallel>], iteration_bounds = array<i64: 2>, scalar_prefetch = 0 : i64, scratch_operands = 1 : i64, tpu.core_type = #tpu.core_type<tc>, window_params = [{transform_indices = @transform_0, window_bounds = array<i64: 1, 4, 326>}, {pipeline_mode = #tpu.pipeline_mode<synchronous>, transform_indices = @transform_1, window_bounds = array<i64: 9, 8, 4>}, {pipeline_mode = #tpu.pipeline_mode<synchronous>, transform_indices = @transform_2, window_bounds = array<i64: 8, 1>}, {pipeline_mode = #tpu.pipeline_mode<synchronous>, transform_indices = @transform_3, window_bounds = array<i64: 9, 8, 8>}, {pipeline_mode = #tpu.pipeline_mode<synchronous>, transform_indices = @transform_4, window_bounds = array<i64: 8, 1>}, {pipeline_mode = #tpu.pipeline_mode<synchronous>, transform_indices = @transform_5, window_bounds = array<i64: 1, 288>}, {pipeline_mode = #tpu.pipeline_mode<synchronous>, transform_indices = @transform_6, window_bounds = array<i64: 8, 4>}, {pipeline_mode = #tpu.pipeline_mode<synchronous>, transform_indices = @transform_7, window_bounds = array<i64: 8, 1>}, {transform_indices = @transform_8, window_bounds = array<i64: 1, 8, 288>}]} {
    %c0 = arith.constant 0 : index
    %c0_0 = arith.constant 0 : index
    %c0_1 = arith.constant 0 : index
    %0 = vector.load %arg1[%c0, %c0_0, %c0_1] : memref<1x4x326xbf16, #tpu.memory_space<vmem>>, vector<1x4x326xbf16>
    %1 = vector.shape_cast %0 : vector<1x4x326xbf16> to vector<4x326xbf16>
    %cst = arith.constant 0.000000e+00 : f32
    %2 = vector.broadcast %cst : f32 to vector<8x288xf32>
    %c0_2 = arith.constant 0 : index
    %c0_3 = arith.constant 0 : index
    %c0_4 = arith.constant 0 : index
    %3 = vector.load %arg2[%c0_2, %c0_3, %c0_4] : memref<9x8x4xbf16, #tpu.memory_space<vmem>>, vector<1x8x4xbf16>
    %4 = vector.shape_cast %3 : vector<1x8x4xbf16> to vector<8x4xbf16>
    %5 = vector.extract_strided_slice %1 {offsets = [0, 0], sizes = [4, 288], strides = [1, 1]} : vector<4x326xbf16> to vector<4x288xbf16>
    %cst_5 = arith.constant dense<0.000000e+00> : vector<8x288xf32>
    %6 = tpu.matmul %4, %5, %cst_5 {dimension_numbers = #tpu.dot_dimension_numbers<[1], [0], [0], [1], [0, 0, 1, 1], [], []>} : vector<8x4xbf16>, vector<4x288xbf16>, vector<8x288xf32> -> vector<8x288xf32>
    %7 = arith.addf %2, %6 : vector<8x288xf32>
    %c1 = arith.constant 1 : index
    %c0_6 = arith.constant 0 : index
    %c0_7 = arith.constant 0 : index
    %8 = vector.load %arg2[%c1, %c0_6, %c0_7] : memref<9x8x4xbf16, #tpu.memory_space<vmem>>, vector<1x8x4xbf16>
    %9 = vector.shape_cast %8 : vector<1x8x4xbf16> to vector<8x4xbf16>
    %10 = vector.extract_strided_slice %1 {offsets = [0, 1], sizes = [4, 288], strides = [1, 1]} : vector<4x326xbf16> to vector<4x288xbf16>
    %cst_8 = arith.constant dense<0.000000e+00> : vector<8x288xf32>
    %11 = tpu.matmul %9, %10, %cst_8 {dimension_numbers = #tpu.dot_dimension_numbers<[1], [0], [0], [1], [0, 0, 1, 1], [], []>} : vector<8x4xbf16>, vector<4x288xbf16>, vector<8x288xf32> -> vector<8x288xf32>
    %12 = arith.addf %7, %11 : vector<8x288xf32>
    %c2 = arith.constant 2 : index
    %c0_9 = arith.constant 0 : index
    %c0_10 = arith.constant 0 : index
    %13 = vector.load %arg2[%c2, %c0_9, %c0_10] : memref<9x8x4xbf16, #tpu.memory_space<vmem>>, vector<1x8x4xbf16>
    %14 = vector.shape_cast %13 : vector<1x8x4xbf16> to vector<8x4xbf16>
    %15 = vector.extract_strided_slice %1 {offsets = [0, 2], sizes = [4, 288], strides = [1, 1]} : vector<4x326xbf16> to vector<4x288xbf16>
    %cst_11 = arith.constant dense<0.000000e+00> : vector<8x288xf32>
    %16 = tpu.matmul %14, %15, %cst_11 {dimension_numbers = #tpu.dot_dimension_numbers<[1], [0], [0], [1], [0, 0, 1, 1], [], []>} : vector<8x4xbf16>, vector<4x288xbf16>, vector<8x288xf32> -> vector<8x288xf32>
    %17 = arith.addf %12, %16 : vector<8x288xf32>
    %c3 = arith.constant 3 : index
    %c0_12 = arith.constant 0 : index
    %c0_13 = arith.constant 0 : index
    %18 = vector.load %arg2[%c3, %c0_12, %c0_13] : memref<9x8x4xbf16, #tpu.memory_space<vmem>>, vector<1x8x4xbf16>
    %19 = vector.shape_cast %18 : vector<1x8x4xbf16> to vector<8x4xbf16>
    %20 = vector.extract_strided_slice %1 {offsets = [0, 18], sizes = [4, 288], strides = [1, 1]} : vector<4x326xbf16> to vector<4x288xbf16>
    %cst_14 = arith.constant dense<0.000000e+00> : vector<8x288xf32>
    %21 = tpu.matmul %19, %20, %cst_14 {dimension_numbers = #tpu.dot_dimension_numbers<[1], [0], [0], [1], [0, 0, 1, 1], [], []>} : vector<8x4xbf16>, vector<4x288xbf16>, vector<8x288xf32> -> vector<8x288xf32>
    %22 = arith.addf %17, %21 : vector<8x288xf32>
    %c4 = arith.constant 4 : index
    %c0_15 = arith.constant 0 : index
    %c0_16 = arith.constant 0 : index
    %23 = vector.load %arg2[%c4, %c0_15, %c0_16] : memref<9x8x4xbf16, #tpu.memory_space<vmem>>, vector<1x8x4xbf16>
    %24 = vector.shape_cast %23 : vector<1x8x4xbf16> to vector<8x4xbf16>
    %25 = vector.extract_strided_slice %1 {offsets = [0, 19], sizes = [4, 288], strides = [1, 1]} : vector<4x326xbf16> to vector<4x288xbf16>
    %cst_17 = arith.constant dense<0.000000e+00> : vector<8x288xf32>
    %26 = tpu.matmul %24, %25, %cst_17 {dimension_numbers = #tpu.dot_dimension_numbers<[1], [0], [0], [1], [0, 0, 1, 1], [], []>} : vector<8x4xbf16>, vector<4x288xbf16>, vector<8x288xf32> -> vector<8x288xf32>
    %27 = arith.addf %22, %26 : vector<8x288xf32>
    %c5 = arith.constant 5 : index
    %c0_18 = arith.constant 0 : index
    %c0_19 = arith.constant 0 : index
    %28 = vector.load %arg2[%c5, %c0_18, %c0_19] : memref<9x8x4xbf16, #tpu.memory_space<vmem>>, vector<1x8x4xbf16>
    %29 = vector.shape_cast %28 : vector<1x8x4xbf16> to vector<8x4xbf16>
    %30 = vector.extract_strided_slice %1 {offsets = [0, 20], sizes = [4, 288], strides = [1, 1]} : vector<4x326xbf16> to vector<4x288xbf16>
    %cst_20 = arith.constant dense<0.000000e+00> : vector<8x288xf32>
    %31 = tpu.matmul %29, %30, %cst_20 {dimension_numbers = #tpu.dot_dimension_numbers<[1], [0], [0], [1], [0, 0, 1, 1], [], []>} : vector<8x4xbf16>, vector<4x288xbf16>, vector<8x288xf32> -> vector<8x288xf32>
    %32 = arith.addf %27, %31 : vector<8x288xf32>
    %c6 = arith.constant 6 : index
    %c0_21 = arith.constant 0 : index
    %c0_22 = arith.constant 0 : index
    %33 = vector.load %arg2[%c6, %c0_21, %c0_22] : memref<9x8x4xbf16, #tpu.memory_space<vmem>>, vector<1x8x4xbf16>
    %34 = vector.shape_cast %33 : vector<1x8x4xbf16> to vector<8x4xbf16>
    %35 = vector.extract_strided_slice %1 {offsets = [0, 36], sizes = [4, 288], strides = [1, 1]} : vector<4x326xbf16> to vector<4x288xbf16>
    %cst_23 = arith.constant dense<0.000000e+00> : vector<8x288xf32>
    %36 = tpu.matmul %34, %35, %cst_23 {dimension_numbers = #tpu.dot_dimension_numbers<[1], [0], [0], [1], [0, 0, 1, 1], [], []>} : vector<8x4xbf16>, vector<4x288xbf16>, vector<8x288xf32> -> vector<8x288xf32>
    %37 = arith.addf %32, %36 : vector<8x288xf32>
    %c7 = arith.constant 7 : index
    %c0_24 = arith.constant 0 : index
    %c0_25 = arith.constant 0 : index
    %38 = vector.load %arg2[%c7, %c0_24, %c0_25] : memref<9x8x4xbf16, #tpu.memory_space<vmem>>, vector<1x8x4xbf16>
    %39 = vector.shape_cast %38 : vector<1x8x4xbf16> to vector<8x4xbf16>
    %40 = vector.extract_strided_slice %1 {offsets = [0, 37], sizes = [4, 288], strides = [1, 1]} : vector<4x326xbf16> to vector<4x288xbf16>
    %cst_26 = arith.constant dense<0.000000e+00> : vector<8x288xf32>
    %41 = tpu.matmul %39, %40, %cst_26 {dimension_numbers = #tpu.dot_dimension_numbers<[1], [0], [0], [1], [0, 0, 1, 1], [], []>} : vector<8x4xbf16>, vector<4x288xbf16>, vector<8x288xf32> -> vector<8x288xf32>
    %42 = arith.addf %37, %41 : vector<8x288xf32>
    %c8 = arith.constant 8 : index
    %c0_27 = arith.constant 0 : index
    %c0_28 = arith.constant 0 : index
    %43 = vector.load %arg2[%c8, %c0_27, %c0_28] : memref<9x8x4xbf16, #tpu.memory_space<vmem>>, vector<1x8x4xbf16>
    %44 = vector.shape_cast %43 : vector<1x8x4xbf16> to vector<8x4xbf16>
    %45 = vector.extract_strided_slice %1 {offsets = [0, 38], sizes = [4, 288], strides = [1, 1]} : vector<4x326xbf16> to vector<4x288xbf16>
    %cst_29 = arith.constant dense<0.000000e+00> : vector<8x288xf32>
    %46 = tpu.matmul %44, %45, %cst_29 {dimension_numbers = #tpu.dot_dimension_numbers<[1], [0], [0], [1], [0, 0, 1, 1], [], []>} : vector<8x4xbf16>, vector<4x288xbf16>, vector<8x288xf32> -> vector<8x288xf32>
    %47 = arith.addf %42, %46 : vector<8x288xf32>
    %c0_30 = arith.constant 0 : index
    %c0_31 = arith.constant 0 : index
    %48 = vector.load %arg3[%c0_30, %c0_31] : memref<8x1xf32, #tpu.memory_space<vmem>>, vector<8x1xf32>
    %49 = vector.broadcast %48 : vector<8x1xf32> to vector<8x288xf32>
    %50 = arith.addf %47, %49 : vector<8x288xf32>
    %cst_32 = arith.constant 0.000000e+00 : f32
    %51 = vector.broadcast %cst_32 : f32 to vector<8x288xf32>
    %52 = arith.maximumf %50, %51 : vector<8x288xf32>
    %c0_33 = arith.constant 0 : index
    %c0_34 = arith.constant 0 : index
    %53 = vector.load %arg6[%c0_33, %c0_34] : memref<1x288xf32, #tpu.memory_space<vmem>>, vector<1x288xf32>
    %54 = vector.broadcast %53 : vector<1x288xf32> to vector<8x288xf32>
    %55 = arith.mulf %52, %54 : vector<8x288xf32>
    %cst_35 = arith.constant 0.000000e+00 : bf16
    %56 = vector.broadcast %cst_35 : bf16 to vector<8x326xbf16>
    %c0_36 = arith.constant 0 : index
    %c0_37 = arith.constant 0 : index
    %57 = vector.load %arg10[%c0_36, %c0_37] : memref<8x326xbf16, #tpu.memory_space<vmem>>, vector<8x326xbf16>
    tpu.vector_store %arg10[%c0_36, %c0_37], %56 {strides = array<i32>} : memref<8x326xbf16, #tpu.memory_space<vmem>>, vector<8x326xbf16>,
    %58 = arith.truncf %55 : vector<8x288xf32> to vector<8x288xbf16>
    %c0_38 = arith.constant 0 : index
    %c19 = arith.constant 19 : index
    %59 = vector.load %arg10[%c0_38, %c19] : memref<8x326xbf16, #tpu.memory_space<vmem>>, vector<8x288xbf16>
    tpu.vector_store %arg10[%c0_38, %c19], %58 {strides = array<i32>} : memref<8x326xbf16, #tpu.memory_space<vmem>>, vector<8x288xbf16>,
    %c0_39 = arith.constant 0 : index
    %c0_40 = arith.constant 0 : index
    %60 = vector.load %arg10[%c0_39, %c0_40] : memref<8x326xbf16, #tpu.memory_space<vmem>>, vector<8x326xbf16>
    %cst_41 = arith.constant 0.000000e+00 : f32
    %61 = vector.broadcast %cst_41 : f32 to vector<8x288xf32>
    %c0_42 = arith.constant 0 : index
    %c0_43 = arith.constant 0 : index
    %c0_44 = arith.constant 0 : index
    %62 = vector.load %arg4[%c0_42, %c0_43, %c0_44] : memref<9x8x8xbf16, #tpu.memory_space<vmem>>, vector<1x8x8xbf16>
    %63 = vector.shape_cast %62 : vector<1x8x8xbf16> to vector<8x8xbf16>
    %64 = vector.extract_strided_slice %60 {offsets = [0, 0], sizes = [8, 288], strides = [1, 1]} : vector<8x326xbf16> to vector<8x288xbf16>
    %cst_45 = arith.constant dense<0.000000e+00> : vector<8x288xf32>
    %65 = tpu.matmul %63, %64, %cst_45 {dimension_numbers = #tpu.dot_dimension_numbers<[1], [0], [0], [1], [0, 0, 1, 1], [], []>} : vector<8x8xbf16>, vector<8x288xbf16>, vector<8x288xf32> -> vector<8x288xf32>
    %66 = arith.addf %61, %65 : vector<8x288xf32>
    %c1_46 = arith.constant 1 : index
    %c0_47 = arith.constant 0 : index
    %c0_48 = arith.constant 0 : index
    %67 = vector.load %arg4[%c1_46, %c0_47, %c0_48] : memref<9x8x8xbf16, #tpu.memory_space<vmem>>, vector<1x8x8xbf16>
    %68 = vector.shape_cast %67 : vector<1x8x8xbf16> to vector<8x8xbf16>
    %69 = vector.extract_strided_slice %60 {offsets = [0, 1], sizes = [8, 288], strides = [1, 1]} : vector<8x326xbf16> to vector<8x288xbf16>
    %cst_49 = arith.constant dense<0.000000e+00> : vector<8x288xf32>
    %70 = tpu.matmul %68, %69, %cst_49 {dimension_numbers = #tpu.dot_dimension_numbers<[1], [0], [0], [1], [0, 0, 1, 1], [], []>} : vector<8x8xbf16>, vector<8x288xbf16>, vector<8x288xf32> -> vector<8x288xf32>
    %71 = arith.addf %66, %70 : vector<8x288xf32>
    %c2_50 = arith.constant 2 : index
    %c0_51 = arith.constant 0 : index
    %c0_52 = arith.constant 0 : index
    %72 = vector.load %arg4[%c2_50, %c0_51, %c0_52] : memref<9x8x8xbf16, #tpu.memory_space<vmem>>, vector<1x8x8xbf16>
    %73 = vector.shape_cast %72 : vector<1x8x8xbf16> to vector<8x8xbf16>
    %74 = vector.extract_strided_slice %60 {offsets = [0, 2], sizes = [8, 288], strides = [1, 1]} : vector<8x326xbf16> to vector<8x288xbf16>
    %cst_53 = arith.constant dense<0.000000e+00> : vector<8x288xf32>
    %75 = tpu.matmul %73, %74, %cst_53 {dimension_numbers = #tpu.dot_dimension_numbers<[1], [0], [0], [1], [0, 0, 1, 1], [], []>} : vector<8x8xbf16>, vector<8x288xbf16>, vector<8x288xf32> -> vector<8x288xf32>
    %76 = arith.addf %71, %75 : vector<8x288xf32>
    %c3_54 = arith.constant 3 : index
    %c0_55 = arith.constant 0 : index
    %c0_56 = arith.constant 0 : index
    %77 = vector.load %arg4[%c3_54, %c0_55, %c0_56] : memref<9x8x8xbf16, #tpu.memory_space<vmem>>, vector<1x8x8xbf16>
    %78 = vector.shape_cast %77 : vector<1x8x8xbf16> to vector<8x8xbf16>
    %79 = vector.extract_strided_slice %60 {offsets = [0, 18], sizes = [8, 288], strides = [1, 1]} : vector<8x326xbf16> to vector<8x288xbf16>
    %cst_57 = arith.constant dense<0.000000e+00> : vector<8x288xf32>
    %80 = tpu.matmul %78, %79, %cst_57 {dimension_numbers = #tpu.dot_dimension_numbers<[1], [0], [0], [1], [0, 0, 1, 1], [], []>} : vector<8x8xbf16>, vector<8x288xbf16>, vector<8x288xf32> -> vector<8x288xf32>
    %81 = arith.addf %76, %80 : vector<8x288xf32>
    %c4_58 = arith.constant 4 : index
    %c0_59 = arith.constant 0 : index
    %c0_60 = arith.constant 0 : index
    %82 = vector.load %arg4[%c4_58, %c0_59, %c0_60] : memref<9x8x8xbf16, #tpu.memory_space<vmem>>, vector<1x8x8xbf16>
    %83 = vector.shape_cast %82 : vector<1x8x8xbf16> to vector<8x8xbf16>
    %84 = vector.extract_strided_slice %60 {offsets = [0, 19], sizes = [8, 288], strides = [1, 1]} : vector<8x326xbf16> to vector<8x288xbf16>
    %cst_61 = arith.constant dense<0.000000e+00> : vector<8x288xf32>
    %85 = tpu.matmul %83, %84, %cst_61 {dimension_numbers = #tpu.dot_dimension_numbers<[1], [0], [0], [1], [0, 0, 1, 1], [], []>} : vector<8x8xbf16>, vector<8x288xbf16>, vector<8x288xf32> -> vector<8x288xf32>
    %86 = arith.addf %81, %85 : vector<8x288xf32>
    %c5_62 = arith.constant 5 : index
    %c0_63 = arith.constant 0 : index
    %c0_64 = arith.constant 0 : index
    %87 = vector.load %arg4[%c5_62, %c0_63, %c0_64] : memref<9x8x8xbf16, #tpu.memory_space<vmem>>, vector<1x8x8xbf16>
    %88 = vector.shape_cast %87 : vector<1x8x8xbf16> to vector<8x8xbf16>
    %89 = vector.extract_strided_slice %60 {offsets = [0, 20], sizes = [8, 288], strides = [1, 1]} : vector<8x326xbf16> to vector<8x288xbf16>
    %cst_65 = arith.constant dense<0.000000e+00> : vector<8x288xf32>
    %90 = tpu.matmul %88, %89, %cst_65 {dimension_numbers = #tpu.dot_dimension_numbers<[1], [0], [0], [1], [0, 0, 1, 1], [], []>} : vector<8x8xbf16>, vector<8x288xbf16>, vector<8x288xf32> -> vector<8x288xf32>
    %91 = arith.addf %86, %90 : vector<8x288xf32>
    %c6_66 = arith.constant 6 : index
    %c0_67 = arith.constant 0 : index
    %c0_68 = arith.constant 0 : index
    %92 = vector.load %arg4[%c6_66, %c0_67, %c0_68] : memref<9x8x8xbf16, #tpu.memory_space<vmem>>, vector<1x8x8xbf16>
    %93 = vector.shape_cast %92 : vector<1x8x8xbf16> to vector<8x8xbf16>
    %94 = vector.extract_strided_slice %60 {offsets = [0, 36], sizes = [8, 288], strides = [1, 1]} : vector<8x326xbf16> to vector<8x288xbf16>
    %cst_69 = arith.constant dense<0.000000e+00> : vector<8x288xf32>
    %95 = tpu.matmul %93, %94, %cst_69 {dimension_numbers = #tpu.dot_dimension_numbers<[1], [0], [0], [1], [0, 0, 1, 1], [], []>} : vector<8x8xbf16>, vector<8x288xbf16>, vector<8x288xf32> -> vector<8x288xf32>
    %96 = arith.addf %91, %95 : vector<8x288xf32>
    %c7_70 = arith.constant 7 : index
    %c0_71 = arith.constant 0 : index
    %c0_72 = arith.constant 0 : index
    %97 = vector.load %arg4[%c7_70, %c0_71, %c0_72] : memref<9x8x8xbf16, #tpu.memory_space<vmem>>, vector<1x8x8xbf16>
    %98 = vector.shape_cast %97 : vector<1x8x8xbf16> to vector<8x8xbf16>
    %99 = vector.extract_strided_slice %60 {offsets = [0, 37], sizes = [8, 288], strides = [1, 1]} : vector<8x326xbf16> to vector<8x288xbf16>
    %cst_73 = arith.constant dense<0.000000e+00> : vector<8x288xf32>
    %100 = tpu.matmul %98, %99, %cst_73 {dimension_numbers = #tpu.dot_dimension_numbers<[1], [0], [0], [1], [0, 0, 1, 1], [], []>} : vector<8x8xbf16>, vector<8x288xbf16>, vector<8x288xf32> -> vector<8x288xf32>
    %101 = arith.addf %96, %100 : vector<8x288xf32>
    %c8_74 = arith.constant 8 : index
    %c0_75 = arith.constant 0 : index
    %c0_76 = arith.constant 0 : index
    %102 = vector.load %arg4[%c8_74, %c0_75, %c0_76] : memref<9x8x8xbf16, #tpu.memory_space<vmem>>, vector<1x8x8xbf16>
    %103 = vector.shape_cast %102 : vector<1x8x8xbf16> to vector<8x8xbf16>
    %104 = vector.extract_strided_slice %60 {offsets = [0, 38], sizes = [8, 288], strides = [1, 1]} : vector<8x326xbf16> to vector<8x288xbf16>
    %cst_77 = arith.constant dense<0.000000e+00> : vector<8x288xf32>
    %105 = tpu.matmul %103, %104, %cst_77 {dimension_numbers = #tpu.dot_dimension_numbers<[1], [0], [0], [1], [0, 0, 1, 1], [], []>} : vector<8x8xbf16>, vector<8x288xbf16>, vector<8x288xf32> -> vector<8x288xf32>
    %106 = arith.addf %101, %105 : vector<8x288xf32>
    %c0_78 = arith.constant 0 : index
    %c0_79 = arith.constant 0 : index
    %107 = vector.load %arg5[%c0_78, %c0_79] : memref<8x1xf32, #tpu.memory_space<vmem>>, vector<8x1xf32>
    %108 = vector.broadcast %107 : vector<8x1xf32> to vector<8x288xf32>
    %109 = arith.addf %106, %108 : vector<8x288xf32>
    %110 = vector.extract_strided_slice %1 {offsets = [0, 19], sizes = [4, 288], strides = [1, 1]} : vector<4x326xbf16> to vector<4x288xbf16>
    %c0_80 = arith.constant 0 : index
    %c0_81 = arith.constant 0 : index
    %111 = vector.load %arg7[%c0_80, %c0_81] : memref<8x4xbf16, #tpu.memory_space<vmem>>, vector<8x4xbf16>
    %cst_82 = arith.constant dense<0.000000e+00> : vector<8x288xf32>
    %112 = tpu.matmul %111, %110, %cst_82 {dimension_numbers = #tpu.dot_dimension_numbers<[1], [0], [0], [1], [0, 0, 1, 1], [], []>} : vector<8x4xbf16>, vector<4x288xbf16>, vector<8x288xf32> -> vector<8x288xf32>
    %113 = arith.addf %109, %112 : vector<8x288xf32>
    %c0_83 = arith.constant 0 : index
    %c0_84 = arith.constant 0 : index
    %114 = vector.load %arg8[%c0_83, %c0_84] : memref<8x1xf32, #tpu.memory_space<vmem>>, vector<8x1xf32>
    %115 = vector.broadcast %114 : vector<8x1xf32> to vector<8x288xf32>
    %116 = arith.addf %113, %115 : vector<8x288xf32>
    %cst_85 = arith.constant 0.000000e+00 : f32
    %117 = vector.broadcast %cst_85 : f32 to vector<8x288xf32>
    %118 = arith.maximumf %116, %117 : vector<8x288xf32>
    %c0_86 = arith.constant 0 : index
    %c0_87 = arith.constant 0 : index
    %c0_88 = arith.constant 0 : index
    %119 = vector.load %arg9[%c0_86, %c0_87, %c0_88] : memref<1x8x288xf32, #tpu.memory_space<vmem>>, vector<1x8x288xf32>
    %120 = vector.shape_cast %119 : vector<1x8x288xf32> to vector<8x288xf32>
    %121 = vector.shape_cast %118 : vector<8x288xf32> to vector<1x8x288xf32>
    tpu.vector_store %arg9[%c0_86, %c0_87, %c0_88], %121 {strides = array<i32>} : memref<1x8x288xf32, #tpu.memory_space<vmem>>, vector<1x8x288xf32>,
    return
  }
  func.func @transform_0(%arg0: i32) -> (i32, i32, i32) {
    %c0_i32 = arith.constant 0 : i32
    %c0_i32_0 = arith.constant 0 : i32
    %c0_i32_1 = arith.constant 0 : i32
    return %arg0, %c0_i32, %c0_i32_0 : i32, i32, i32
  }
  func.func @transform_1(%arg0: i32) -> (i32, i32, i32) {
    %c0_i32 = arith.constant 0 : i32
    %c0_i32_0 = arith.constant 0 : i32
    %c0_i32_1 = arith.constant 0 : i32
    %c0_i32_2 = arith.constant 0 : i32
    return %c0_i32, %c0_i32_0, %c0_i32_1 : i32, i32, i32
  }
  func.func @transform_2(%arg0: i32) -> (i32, i32) {
    %c0_i32 = arith.constant 0 : i32
    %c0_i32_0 = arith.constant 0 : i32
    %c0_i32_1 = arith.constant 0 : i32
    return %c0_i32, %c0_i32_0 : i32, i32
  }
  func.func @transform_3(%arg0: i32) -> (i32, i32, i32) {
    %c0_i32 = arith.constant 0 : i32
    %c0_i32_0 = arith.constant 0 : i32
    %c0_i32_1 = arith.constant 0 : i32
    %c0_i32_2 = arith.constant 0 : i32
    return %c0_i32, %c0_i32_0, %c0_i32_1 : i32, i32, i32
  }
  func.func @transform_4(%arg0: i32) -> (i32, i32) {
    %c0_i32 = arith.constant 0 : i32
    %c0_i32_0 = arith.constant 0 : i32
    %c0_i32_1 = arith.constant 0 : i32
    return %c0_i32, %c0_i32_0 : i32, i32
  }
  func.func @transform_5(%arg0: i32) -> (i32, i32) {
    %c0_i32 = arith.constant 0 : i32
    %c0_i32_0 = arith.constant 0 : i32
    %c0_i32_1 = arith.constant 0 : i32
    return %c0_i32, %c0_i32_0 : i32, i32
  }
  func.func @transform_6(%arg0: i32) -> (i32, i32) {
    %c0_i32 = arith.constant 0 : i32
    %c0_i32_0 = arith.constant 0 : i32
    %c0_i32_1 = arith.constant 0 : i32
    return %c0_i32, %c0_i32_0 : i32, i32
  }
  func.func @transform_7(%arg0: i32) -> (i32, i32) {
    %c0_i32 = arith.constant 0 : i32
    %c0_i32_0 = arith.constant 0 : i32
    %c0_i32_1 = arith.constant 0 : i32
    return %c0_i32, %c0_i32_0 : i32, i32
  }
  func.func @transform_8(%arg0: i32) -> (i32, i32, i32) {
    %c0_i32 = arith.constant 0 : i32
    %c0_i32_0 = arith.constant 0 : i32
    %c0_i32_1 = arith.constant 0 : i32
    return %arg0, %c0_i32, %c0_i32_0 : i32, i32, i32
  }
}

</mosaic_0001>

<llo_original>
// kernel: tpu_custom_call.1
$region0: #{tpu_custom_call.1}
  #allocation0 [shape = 'u32[]', space=smem, size = 0x4, offset = 0x4, fixed_abs, tag = 'smem constant byte address 0x4 - core index']
  #allocation1 [shape = 'u32[72,128]{1,0:T(1,128)}', space=vmem, size = 0x9000, scoped, tag = 'internal scratch']
  #allocation2 [shape = 'bf16[8,326]{1,0:T(8,128)(2,1)}', space=vmem, size = 0x1800, scoped, tag = 'scratch operand']
  %s0 = inlined_call_operand.vmem [shape: bf16[2,4,326], index: 0, kind: input, shape index: {}]
  %s1 = inlined_call_operand.vmem [shape: bf16[9,8,4], index: 1, kind: input, shape index: {}]
  %s2 = inlined_call_operand.vmem [shape: f32[8,1], index: 2, kind: input, shape index: {}]
  %s3 = inlined_call_operand.vmem [shape: bf16[9,8,8], index: 3, kind: input, shape index: {}]
  %s4 = inlined_call_operand.vmem [shape: f32[8,1], index: 4, kind: input, shape index: {}]
  %s5 = inlined_call_operand.vmem [shape: f32[1,288], index: 5, kind: input, shape index: {}]
  %s6 = inlined_call_operand.vmem [shape: bf16[8,4], index: 6, kind: input, shape index: {}]
  %s7 = inlined_call_operand.vmem [shape: f32[8,1], index: 7, kind: input, shape index: {}]
  %s8 = inlined_call_operand.hbm [shape: f32[2,8,288], index: 8, kind: output, shape index: {}]
  %s9 = sld [smem:[#allocation0]]
  $region65: #{tpu_custom_call.1} parent=0
    _
  %s11 = ssub.s32 1, %s9
  %s12 = scalar_select 0, %s11, %s9
  $region1: #{tpu_custom_call.1} parent=0
    #allocation3 [shape = 'u8[24576]{0}', space=vmem, size = 0x6000, scoped, tag = 'output window, operand 0']
    #allocation4 [shape = 's32[2]{0}', space=sflag, size = 0x8, scoped, tag = 'scoped memory for tpu_custom_call.1']
    %13 = vsyncpa [#allocation4], 0
    %s14 = scalar_lea.sflag [#allocation4], 1
    %15 = vsyncpa %s14, 0
    loop: start=0, step=1, limit=4
    $region2: #{tpu_custom_call.1} parent=1 // loop_pre_header
      _
    $region3: #{tpu_custom_call.1} parent=1 // loop_header
      %s17 = sphi 0, %s21
      %p18 = scmp.ge.s32.totalorder %s17, 4
      %s27 = sphi 0, %s29
      %s30 = sphi 0, %s27
      %s31 = sphi 0, %s30
      %s47 = sphi 0, %s31
      %s51 = sphi 0, %s51
      %s53 = sphi 0, %s51
      %s54 = sphi 0, %s53
      %s68 = sphi 0, %s54
      %s72 = sphi 0, %s72
      %s74 = sphi 0, %s72
      %s75 = sphi 0, %s74
      %s89 = sphi 0, %s75
      %s93 = sphi 0, %s93
      %s95 = sphi 0, %s93
      %s96 = sphi 0, %s95
      %s110 = sphi 0, %s96
      %s114 = sphi 0, %s114
      %s116 = sphi 0, %s114
      %s117 = sphi 0, %s116
      %s131 = sphi 0, %s117
      %s135 = sphi 0, %s135
      %s137 = sphi 0, %s135
      %s138 = sphi 0, %s137
      %s152 = sphi 0, %s138
      %s156 = sphi 0, %s156
      %s158 = sphi 0, %s156
      %s159 = sphi 0, %s158
      %s173 = sphi 0, %s159
      %s177 = sphi 0, %s177
      %s179 = sphi 0, %s177
      %s180 = sphi 0, %s179
      %s194 = sphi 0, %s180
      %s200 = sphi 0, %s202
      %s203 = sphi 0, %s200
      %s204 = sphi 0, %s203
      %s220 = sphi 0, %s204
    $region4: #{tpu_custom_call.1} parent=1 // loop_header_branch
      %20 = sbr.rel (%p18) target = $region8
    $region5: #{tpu_custom_call.1} parent=1 // loop_body
      %s22 = ssub.s32 %s17, 1
      %s23 = ssub.s32 %s17, 2
      %s24 = sadd.s32 %s17, 1
      %s25 = ssub.s32 %s17, %s24
      %p26 = scmp.eq.s32.totalorder %s25, 0
      %s28 = sadd.s32 %s27, 1
      %s29 = scalar_select %p26, %s27, %s28
      %p32 = pneg %p26
      %p33 = scmp.eq.s32.totalorder %s17, 1
      %p34 = por %p32, %p33
      %p35 = scmp.ne.s32.totalorder %s27, %s30
      %p36 = scmp.eq.s32.totalorder %s17, 0
      %p37 = por %p35, %p36
      %p38 = scmp.ne.s32.totalorder %s27, %s30
      %p39 = scmp.eq.s32.totalorder %s22, 1
      %p40 = por %p38, %p39
      %p41 = scmp.ne.s32.totalorder %s30, %s31
      %p42 = scmp.eq.s32.totalorder %s22, 0
      %p43 = por %p41, %p42
      %p44 = scmp.ne.s32.totalorder %s30, %s31
      %p45 = scmp.eq.s32.totalorder %s23, 1
      %p46 = por %p44, %p45
      %p48 = scmp.ne.s32.totalorder %s31, %s47
      %p49 = scmp.eq.s32.totalorder %s23, 0
      %p50 = por %p48, %p49
      %s52 = sadd.s32 %s51, 1
      %p55 = scmp.eq.s32.totalorder %s17, 1
      %p56 = scmp.ne.s32.totalorder %s51, %s53
      %p57 = scmp.eq.s32.totalorder %s17, 0
      %p58 = por %p56, %p57
      %p59 = scmp.ne.s32.totalorder %s51, %s53
      %p60 = scmp.eq.s32.totalorder %s22, 1
      %p61 = por %p59, %p60
      %p62 = scmp.ne.s32.totalorder %s53, %s54
      %p63 = scmp.eq.s32.totalorder %s22, 0
      %p64 = por %p62, %p63
      %p65 = scmp.ne.s32.totalorder %s53, %s54
      %p66 = scmp.eq.s32.totalorder %s23, 1
      %p67 = por %p65, %p66
      %p69 = scmp.ne.s32.totalorder %s54, %s68
      %p70 = scmp.eq.s32.totalorder %s23, 0
      %p71 = por %p69, %p70
      %s73 = sadd.s32 %s72, 1
      %p76 = scmp.eq.s32.totalorder %s17, 1
      %p77 = scmp.ne.s32.totalorder %s72, %s74
      %p78 = scmp.eq.s32.totalorder %s17, 0
      %p79 = por %p77, %p78
      %p80 = scmp.ne.s32.totalorder %s72, %s74
      %p81 = scmp.eq.s32.totalorder %s22, 1
      %p82 = por %p80, %p81
      %p83 = scmp.ne.s32.totalorder %s74, %s75
      %p84 = scmp.eq.s32.totalorder %s22, 0
      %p85 = por %p83, %p84
      %p86 = scmp.ne.s32.totalorder %s74, %s75
      %p87 = scmp.eq.s32.totalorder %s23, 1
      %p88 = por %p86, %p87
      %p90 = scmp.ne.s32.totalorder %s75, %s89
      %p91 = scmp.eq.s32.totalorder %s23, 0
      %p92 = por %p90, %p91
      %s94 = sadd.s32 %s93, 1
      %p97 = scmp.eq.s32.totalorder %s17, 1
      %p98 = scmp.ne.s32.totalorder %s93, %s95
      %p99 = scmp.eq.s32.totalorder %s17, 0
      %p100 = por %p98, %p99
      %p101 = scmp.ne.s32.totalorder %s93, %s95
      %p102 = scmp.eq.s32.totalorder %s22, 1
      %p103 = por %p101, %p102
      %p104 = scmp.ne.s32.totalorder %s95, %s96
      %p105 = scmp.eq.s32.totalorder %s22, 0
      %p106 = por %p104, %p105
      %p107 = scmp.ne.s32.totalorder %s95, %s96
      %p108 = scmp.eq.s32.totalorder %s23, 1
      %p109 = por %p107, %p108
      %p111 = scmp.ne.s32.totalorder %s96, %s110
      %p112 = scmp.eq.s32.totalorder %s23, 0
      %p113 = por %p111, %p112
      %s115 = sadd.s32 %s114, 1
      %p118 = scmp.eq.s32.totalorder %s17, 1
      %p119 = scmp.ne.s32.totalorder %s114, %s116
      %p120 = scmp.eq.s32.totalorder %s17, 0
      %p121 = por %p119, %p120
      %p122 = scmp.ne.s32.totalorder %s114, %s116
      %p123 = scmp.eq.s32.totalorder %s22, 1
      %p124 = por %p122, %p123
      %p125 = scmp.ne.s32.totalorder %s116, %s117
      %p126 = scmp.eq.s32.totalorder %s22, 0
      %p127 = por %p125, %p126
      %p128 = scmp.ne.s32.totalorder %s116, %s117
      %p129 = scmp.eq.s32.totalorder %s23, 1
      %p130 = por %p128, %p129
      %p132 = scmp.ne.s32.totalorder %s117, %s131
      %p133 = scmp.eq.s32.totalorder %s23, 0
      %p134 = por %p132, %p133
      %s136 = sadd.s32 %s135, 1
      %p139 = scmp.eq.s32.totalorder %s17, 1
      %p140 = scmp.ne.s32.totalorder %s135, %s137
      %p141 = scmp.eq.s32.totalorder %s17, 0
      %p142 = por %p140, %p141
      %p143 = scmp.ne.s32.totalorder %s135, %s137
      %p144 = scmp.eq.s32.totalorder %s22, 1
      %p145 = por %p143, %p144
      %p146 = scmp.ne.s32.totalorder %s137, %s138
      %p147 = scmp.eq.s32.totalorder %s22, 0
      %p148 = por %p146, %p147
      %p149 = scmp.ne.s32.totalorder %s137, %s138
      %p150 = scmp.eq.s32.totalorder %s23, 1
      %p151 = por %p149, %p150
      %p153 = scmp.ne.s32.totalorder %s138, %s152
      %p154 = scmp.eq.s32.totalorder %s23, 0
      %p155 = por %p153, %p154
      %s157 = sadd.s32 %s156, 1
      %p160 = scmp.eq.s32.totalorder %s17, 1
      %p161 = scmp.ne.s32.totalorder %s156, %s158
      %p162 = scmp.eq.s32.totalorder %s17, 0
      %p163 = por %p161, %p162
      %p164 = scmp.ne.s32.totalorder %s156, %s158
      %p165 = scmp.eq.s32.totalorder %s22, 1
      %p166 = por %p164, %p165
      %p167 = scmp.ne.s32.totalorder %s158, %s159
      %p168 = scmp.eq.s32.totalorder %s22, 0
      %p169 = por %p167, %p168
      %p170 = scmp.ne.s32.totalorder %s158, %s159
      %p171 = scmp.eq.s32.totalorder %s23, 1
      %p172 = por %p170, %p171
      %p174 = scmp.ne.s32.totalorder %s159, %s173
      %p175 = scmp.eq.s32.totalorder %s23, 0
      %p176 = por %p174, %p175
      %s178 = sadd.s32 %s177, 1
      %p181 = scmp.eq.s32.totalorder %s17, 1
      %p182 = scmp.ne.s32.totalorder %s177, %s179
      %p183 = scmp.eq.s32.totalorder %s17, 0
      %p184 = por %p182, %p183
      %p185 = scmp.ne.s32.totalorder %s177, %s179
      %p186 = scmp.eq.s32.totalorder %s22, 1
      %p187 = por %p185, %p186
      %p188 = scmp.ne.s32.totalorder %s179, %s180
      %p189 = scmp.eq.s32.totalorder %s22, 0
      %p190 = por %p188, %p189
      %p191 = scmp.ne.s32.totalorder %s179, %s180
      %p192 = scmp.eq.s32.totalorder %s23, 1
      %p193 = por %p191, %p192
      %p195 = scmp.ne.s32.totalorder %s180, %s194
      %p196 = scmp.eq.s32.totalorder %s23, 0
      %p197 = por %p195, %p196
      %s198 = ssub.s32 %s17, %s24
      %p199 = scmp.eq.s32.totalorder %s198, 0
      %s201 = sadd.s32 %s200, 1
      %s202 = scalar_select %p199, %s200, %s201
      %p205 = pneg %p199
      %p206 = scmp.eq.s32.totalorder %s17, 1
      %p207 = por %p205, %p206
      %p208 = scmp.ne.s32.totalorder %s200, %s203
      %p209 = scmp.eq.s32.totalorder %s17, 0
      %p210 = por %p208, %p209
      %p211 = scmp.ne.s32.totalorder %s200, %s203
      %p212 = scmp.eq.s32.totalorder %s22, 1
      %p213 = por %p211, %p212
      %p214 = scmp.ne.s32.totalorder %s203, %s204
      %p215 = scmp.eq.s32.totalorder %s22, 0
      %p216 = por %p214, %p215
      %p217 = scmp.ne.s32.totalorder %s203, %s204
      %p218 = scmp.eq.s32.totalorder %s23, 1
      %p219 = por %p217, %p218
      %p221 = scmp.ne.s32.totalorder %s204, %s220
      %p222 = scmp.eq.s32.totalorder %s23, 0
      %p223 = por %p221, %p222
      %p224 = scmp.le.s32.totalorder 1, %s17
      %p225 = scmp.lt.s32.totalorder %s17, 3
      %p226 = pnand %p224, %p225
      %p227 = pneg %p226
      // Predicated region
      $region9: #{tpu_custom_call.1} parent=5 // pred_check
        _
      $region10: #{tpu_custom_call.1} parent=5 // pred_check_branch
        %229 = sbr.rel (%p226) target = $region12
      $region11: #{tpu_custom_call.1} parent=5 // pred_region
        %s230 = ssub.s32 %s17, 1
        // Predicated region
        $region13: #{tpu_custom_call.1} parent=11 // pred_check
          %p231 = pneg %p64
        $region14: #{tpu_custom_call.1} parent=11 // pred_check_branch
          %233 = sbr.rel (%p231) target = $region16
        $region15: #{tpu_custom_call.1} parent=11 // pred_region
          _
        $region16: #{tpu_custom_call.1} parent=11 // pred_fallthru
          _
        // Predicated region
        $region17: #{tpu_custom_call.1} parent=11 // pred_check
          %p234 = pneg %p85
        $region18: #{tpu_custom_call.1} parent=11 // pred_check_branch
          %236 = sbr.rel (%p234) target = $region20
        $region19: #{tpu_custom_call.1} parent=11 // pred_region
          _
        $region20: #{tpu_custom_call.1} parent=11 // pred_fallthru
          _
        // Predicated region
        $region21: #{tpu_custom_call.1} parent=11 // pred_check
          %p237 = pneg %p106
        $region22: #{tpu_custom_call.1} parent=11 // pred_check_branch
          %239 = sbr.rel (%p237) target = $region24
        $region23: #{tpu_custom_call.1} parent=11 // pred_region
          _
        $region24: #{tpu_custom_call.1} parent=11 // pred_fallthru
          _
        // Predicated region
        $region25: #{tpu_custom_call.1} parent=11 // pred_check
          %p240 = pneg %p127
        $region26: #{tpu_custom_call.1} parent=11 // pred_check_branch
          %242 = sbr.rel (%p240) target = $region28
        $region27: #{tpu_custom_call.1} parent=11 // pred_region
          _
        $region28: #{tpu_custom_call.1} parent=11 // pred_fallthru
          _
        // Predicated region
        $region29: #{tpu_custom_call.1} parent=11 // pred_check
          %p243 = pneg %p148
        $region30: #{tpu_custom_call.1} parent=11 // pred_check_branch
          %245 = sbr.rel (%p243) target = $region32
        $region31: #{tpu_custom_call.1} parent=11 // pred_region
          _
        $region32: #{tpu_custom_call.1} parent=11 // pred_fallthru
          _
        // Predicated region
        $region33: #{tpu_custom_call.1} parent=11 // pred_check
          %p246 = pneg %p169
        $region34: #{tpu_custom_call.1} parent=11 // pred_check_branch
          %248 = sbr.rel (%p246) target = $region36
        $region35: #{tpu_custom_call.1} parent=11 // pred_region
          _
        $region36: #{tpu_custom_call.1} parent=11 // pred_fallthru
          _
        // Predicated region
        $region37: #{tpu_custom_call.1} parent=11 // pred_check
          %p249 = pneg %p190
        $region38: #{tpu_custom_call.1} parent=11 // pred_check_branch
          %251 = sbr.rel (%p249) target = $region40
        $region39: #{tpu_custom_call.1} parent=11 // pred_region
          _
        $region40: #{tpu_custom_call.1} parent=11 // pred_fallthru
          _
      $region12: #{tpu_custom_call.1} parent=5 // pred_fallthru
        _
      %p252 = scmp.lt.s32.totalorder %s17, 2
      // Predicated region
      $region41: #{tpu_custom_call.1} parent=5 // pred_check
        %p253 = pneg %p252
      $region42: #{tpu_custom_call.1} parent=5 // pred_check_branch
        %255 = sbr.rel (%p253) target = $region44
      $region43: #{tpu_custom_call.1} parent=5 // pred_region
        // Predicated region
        $region45: #{tpu_custom_call.1} parent=43 // pred_check
          %p256 = pneg %p37
        $region46: #{tpu_custom_call.1} parent=43 // pred_check_branch
          %258 = sbr.rel (%p256) target = $region48
        $region47: #{tpu_custom_call.1} parent=43 // pred_region
          %p259 = scmp.lt.s32.totalorder %s17, 1
          %s260 = scalar_select %p259, %s17, 1
          %s261 = smul.addr %s260, 3
          %s262 = smul.addr %s261, 2
          %s263 = scalar_lea.vmem %s0, %s262
        $region48: #{tpu_custom_call.1} parent=43 // pred_fallthru
          _
      $region44: #{tpu_custom_call.1} parent=5 // pred_fallthru
        _
      %p264 = scmp.le.s32.totalorder 1, %s17
      %p265 = scmp.lt.s32.totalorder %s17, 3
      %p266 = pnand %p264, %p265
      %p267 = pneg %p266
      // Predicated region
      $region49: #{tpu_custom_call.1} parent=5 // pred_check
        _
      $region50: #{tpu_custom_call.1} parent=5 // pred_check_branch
        %269 = sbr.rel (%p266) target = $region52
      $region51: #{tpu_custom_call.1} parent=5 // pred_region
        %s270 = ssub.s32 %s17, 1
        %p271 = scmp.lt.s32.totalorder %s22, 1
        %s272 = scalar_select %p271, %s22, 1
        %s273 = smul.addr %s272, 3
        %s274 = smul.addr %s273, 2
        %s275 = scalar_lea.vmem %s0, %s274
        %p276 = pneg %p43
        %p277 = pneg %p40
        %p278 = pneg %p64
        %p279 = pneg %p61
        %p280 = pneg %p85
        %p281 = pneg %p82
        %p282 = pneg %p106
        %p283 = pneg %p103
        %p284 = pneg %p127
        %p285 = pneg %p124
        %p286 = pneg %p148
        %p287 = pneg %p145
        %p288 = pneg %p169
        %p289 = pneg %p166
        %p290 = pneg %p190
        %p291 = pneg %p187
        %p292 = pneg %p216
        %p293 = pneg %p213
        %s294 = sand.u32 %s203, 1
        %s295 = scalar_lea.sflag [#allocation4], %s294
        %s296 = sand.u32 %s203, 1
        %s297 = smul.addr %s296, 24
        %s298 = scalar_lea.vmem [#allocation3], %s297
        %p299 = scmp.lt.s32.totalorder %s22, 1
        %s300 = scalar_select %p299, %s22, 1
        %s301 = smul.addr %s300, 3
        %s302 = smul.addr %s301, 2
        %s303 = scalar_lea.vmem %s0, %s302
        %v305 = vld [vmem:[%s303] sm:$0x3f]
        %v306 = vld [vmem:[%s1] sm:$0xf]
        %s307 = scalar_lea.vmem %s1, 4
        %v308 = vld [vmem:[%s307] sm:$0xf]
        %310 = vst [vmem:[#allocation1] ss:$4 sm:$0xff] %v305
        %v311 = vld.sshfl [vmem:[#allocation1] sm:$0xff pattern:$0x73625140]
        %v313 = vld.sshfl [vmem:[#allocation1 + $0x8] sm:$0xff pattern:$0x73625140]
        %v315 = vld.sshfl [vmem:[#allocation1 + $0x10] sm:$0xff pattern:$0x73625140]
        %317 = vrot.lane.b32.xlu0 %v311, 127
        %v318 = vpop.permute.xlu0 %317
        %319 = vrot.lane.b32.xlu0 %v313, 127
        %v320 = vpop.permute.xlu0 %319
        %321 = vrot.lane.b32.xlu0 %v315, 127
        %v322 = vpop.permute.xlu0 %321
        %vm323 = vcmask 1039360
        %v324 = vsel %vm323, %v318, %v320
        %v325 = vsel %vm323, %v320, %v322
        %vm326 = vcmask 31744
        %v328 = vsel %vm326, %v308, 0
        %vm330 = vcmask 1041408
        %v332 = vsel %vm330, %v324, 0
        %v335 = vsel %vm330, %v325, 0
        %v338 = vsel %vm330, %v322, 0
        %340 = vmatpush.bf16.msra.mxu0 0
        %341 = vmatpush.bf16.msra.mxu0 0
        %342 = vmatpush.bf16.msra.mxu0 0
        %343 = vmatpush.bf16.msra.mxu0 0
        %344 = vmatpush.bf16.msra.mxu0 0
        %345 = vmatpush.bf16.msra.mxu0 0
        %346 = vmatpush.bf16.msra.mxu0 0
        %347 = vmatpush.bf16.msra.mxu0 %v332
        %348 = vmatmul.bf16.gmra.mxu0 %v328
        %v349 = vpop.f32.mrf.mxu0
        %v350 = vadd.f32 0.0, %v349
        %v351 = vpop.f32.mrf.mxu0
        %352 = vdwg.mxu0
        %353 = vmatpush.bf16.msra.mxu0 0
        %354 = vmatpush.bf16.msra.mxu0 0
        %355 = vmatpush.bf16.msra.mxu0 0
        %356 = vmatpush.bf16.msra.mxu0 0
        %357 = vmatpush.bf16.msra.mxu0 0
        %358 = vmatpush.bf16.msra.mxu0 0
        %359 = vmatpush.bf16.msra.mxu0 0
        %360 = vmatpush.bf16.msra.mxu0 %v335
        %361 = vmatmul.bf16.gmra.mxu0 %v328
        %v362 = vpop.f32.mrf.mxu0
        %v363 = vadd.f32 0.0, %v362
        %v364 = vpop.f32.mrf.mxu0
        %365 = vdwg.mxu0
        %366 = vmatpush.bf16.msra.mxu0 0
        %367 = vmatpush.bf16.msra.mxu0 0
        %368 = vmatpush.bf16.msra.mxu0 0
        %369 = vmatpush.bf16.msra.mxu0 0
        %370 = vmatpush.bf16.msra.mxu0 0
        %371 = vmatpush.bf16.msra.mxu0 0
        %372 = vmatpush.bf16.msra.mxu0 0
        %373 = vmatpush.bf16.msra.mxu0 %v338
        %374 = vmatmul.bf16.gmra.mxu0 %v328
        %v375 = vpop.f32.mrf.mxu0
        %v376 = vadd.f32 0.0, %v375
        %v377 = vpop.f32.mrf.mxu0
        %378 = vdwg.mxu0
        %379 = vst [vmem:[#allocation1] ss:$4 sm:$0xff] %v305
        %v380 = vld.sshfl [vmem:[#allocation1] sm:$0xff pattern:$0x73625140]
        %v381 = vld.sshfl [vmem:[#allocation1 + $0x8] sm:$0xff pattern:$0x73625140]
        %v382 = vld.sshfl [vmem:[#allocation1 + $0x10] sm:$0xff pattern:$0x73625140]
        %v384 = vsel %vm326, %v306, 0
        %v386 = vsel %vm330, %v380, 0
        %v388 = vsel %vm330, %v381, 0
        %v390 = vsel %vm330, %v382, 0
        %392 = vmatpush.bf16.msra.mxu0 0
        %393 = vmatpush.bf16.msra.mxu0 0
        %394 = vmatpush.bf16.msra.mxu0 0
        %395 = vmatpush.bf16.msra.mxu0 0
        %396 = vmatpush.bf16.msra.mxu0 0
        %397 = vmatpush.bf16.msra.mxu0 0
        %398 = vmatpush.bf16.msra.mxu0 0
        %399 = vmatpush.bf16.msra.mxu0 %v386
        %400 = vmatmul.bf16.gmra.mxu0 %v384
        %v401 = vpop.f32.mrf.mxu0
        %v402 = vadd.f32 %v350, %v401
        %v403 = vpop.f32.mrf.mxu0
        %404 = vdwg.mxu0
        %405 = vmatpush.bf16.msra.mxu0 0
        %406 = vmatpush.bf16.msra.mxu0 0
        %407 = vmatpush.bf16.msra.mxu0 0
        %408 = vmatpush.bf16.msra.mxu0 0
        %409 = vmatpush.bf16.msra.mxu0 0
        %410 = vmatpush.bf16.msra.mxu0 0
        %411 = vmatpush.bf16.msra.mxu0 0
        %412 = vmatpush.bf16.msra.mxu0 %v388
        %413 = vmatmul.bf16.gmra.mxu0 %v384
        %v414 = vpop.f32.mrf.mxu0
        %v415 = vadd.f32 %v363, %v414
        %v416 = vpop.f32.mrf.mxu0
        %417 = vdwg.mxu0
        %418 = vmatpush.bf16.msra.mxu0 0
        %419 = vmatpush.bf16.msra.mxu0 0
        %420 = vmatpush.bf16.msra.mxu0 0
        %421 = vmatpush.bf16.msra.mxu0 0
        %422 = vmatpush.bf16.msra.mxu0 0
        %423 = vmatpush.bf16.msra.mxu0 0
        %424 = vmatpush.bf16.msra.mxu0 0
        %425 = vmatpush.bf16.msra.mxu0 %v390
        %426 = vmatmul.bf16.gmra.mxu0 %v384
        %v427 = vpop.f32.mrf.mxu0
        %v428 = vadd.f32 %v376, %v427
        %v429 = vpop.f32.mrf.mxu0
        %430 = vdwg.mxu0
        %s431 = scalar_lea.vmem %s1, 8
        %v432 = vld [vmem:[%s431] sm:$0xf]
        %433 = vst [vmem:[#allocation1] ss:$4 sm:$0xff] %v305
        %v434 = vld.sshfl [vmem:[#allocation1] sm:$0xff pattern:$0x73625140]
        %v436 = vld.sshfl [vmem:[#allocation1 + $0x8] sm:$0xff pattern:$0x73625140]
        %v438 = vld.sshfl [vmem:[#allocation1 + $0x10] sm:$0xff pattern:$0x73625140]
        %440 = vrot.lane.b32.xlu0 %v434, 126
        %v441 = vpop.permute.xlu0 %440
        %442 = vrot.lane.b32.xlu0 %v436, 126
        %v443 = vpop.permute.xlu0 %442
        %444 = vrot.lane.b32.xlu0 %v438, 126
        %v445 = vpop.permute.xlu0 %444
        %vm446 = vcmask 1031168
        %v447 = vsel %vm446, %v441, %v443
        %v448 = vsel %vm446, %v443, %v445
        %v450 = vsel %vm326, %v432, 0
        %v453 = vsel %vm330, %v447, 0
        %v456 = vsel %vm330, %v448, 0
        %v459 = vsel %vm330, %v445, 0
        %461 = vmatpush.bf16.msra.mxu0 0
        %462 = vmatpush.bf16.msra.mxu0 0
        %463 = vmatpush.bf16.msra.mxu0 0
        %464 = vmatpush.bf16.msra.mxu0 0
        %465 = vmatpush.bf16.msra.mxu0 0
        %466 = vmatpush.bf16.msra.mxu0 0
        %467 = vmatpush.bf16.msra.mxu0 0
        %468 = vmatpush.bf16.msra.mxu0 %v453
        %469 = vmatmul.bf16.gmra.mxu0 %v450
        %v470 = vpop.f32.mrf.mxu0
        %v471 = vadd.f32 0.0, %v470
        %v472 = vpop.f32.mrf.mxu0
        %473 = vdwg.mxu0
        %474 = vmatpush.bf16.msra.mxu0 0
        %475 = vmatpush.bf16.msra.mxu0 0
        %476 = vmatpush.bf16.msra.mxu0 0
        %477 = vmatpush.bf16.msra.mxu0 0
        %478 = vmatpush.bf16.msra.mxu0 0
        %479 = vmatpush.bf16.msra.mxu0 0
        %480 = vmatpush.bf16.msra.mxu0 0
        %481 = vmatpush.bf16.msra.mxu0 %v456
        %482 = vmatmul.bf16.gmra.mxu0 %v450
        %v483 = vpop.f32.mrf.mxu0
        %v484 = vadd.f32 0.0, %v483
        %v485 = vpop.f32.mrf.mxu0
        %486 = vdwg.mxu0
        %487 = vmatpush.bf16.msra.mxu0 0
        %488 = vmatpush.bf16.msra.mxu0 0
        %489 = vmatpush.bf16.msra.mxu0 0
        %490 = vmatpush.bf16.msra.mxu0 0
        %491 = vmatpush.bf16.msra.mxu0 0
        %492 = vmatpush.bf16.msra.mxu0 0
        %493 = vmatpush.bf16.msra.mxu0 0
        %494 = vmatpush.bf16.msra.mxu0 %v459
        %495 = vmatmul.bf16.gmra.mxu0 %v450
        %v496 = vpop.f32.mrf.mxu0
        %v497 = vadd.f32 0.0, %v496
        %v498 = vpop.f32.mrf.mxu0
        %499 = vdwg.mxu0
        %v500 = vadd.f32 %v402, %v471
        %v501 = vadd.f32 %v415, %v484
        %v502 = vadd.f32 %v428, %v497
        %s503 = scalar_lea.vmem %s1, 12
        %v504 = vld [vmem:[%s503] sm:$0xf]
        %505 = vst [vmem:[#allocation1] ss:$4 sm:$0xff] %v305
        %v506 = vld.sshfl [vmem:[#allocation1] sm:$0xff pattern:$0x73625140]
        %v508 = vld.sshfl [vmem:[#allocation1 + $0x8] sm:$0xff pattern:$0x73625140]
        %v510 = vld.sshfl [vmem:[#allocation1 + $0x10] sm:$0xff pattern:$0x73625140]
        %512 = vrot.lane.b32.xlu0 %v506, 110
        %v513 = vpop.permute.xlu0 %512
        %514 = vrot.lane.b32.xlu0 %v508, 110
        %v515 = vpop.permute.xlu0 %514
        %516 = vrot.lane.b32.xlu0 %v510, 110
        %v517 = vpop.permute.xlu0 %516
        %vm518 = vcmask 900096
        %v519 = vsel %vm518, %v513, %v515
        %v520 = vsel %vm518, %v515, %v517
        %v522 = vsel %vm326, %v504, 0
        %v525 = vsel %vm330, %v519, 0
        %v528 = vsel %vm330, %v520, 0
        %v531 = vsel %vm330, %v517, 0
        %533 = vmatpush.bf16.msra.mxu0 0
        %534 = vmatpush.bf16.msra.mxu0 0
        %535 = vmatpush.bf16.msra.mxu0 0
        %536 = vmatpush.bf16.msra.mxu0 0
        %537 = vmatpush.bf16.msra.mxu0 0
        %538 = vmatpush.bf16.msra.mxu0 0
        %539 = vmatpush.bf16.msra.mxu0 0
        %540 = vmatpush.bf16.msra.mxu0 %v525
        %541 = vmatmul.bf16.gmra.mxu0 %v522
        %v542 = vpop.f32.mrf.mxu0
        %v543 = vadd.f32 0.0, %v542
        %v544 = vpop.f32.mrf.mxu0
        %545 = vdwg.mxu0
        %546 = vmatpush.bf16.msra.mxu0 0
        %547 = vmatpush.bf16.msra.mxu0 0
        %548 = vmatpush.bf16.msra.mxu0 0
        %549 = vmatpush.bf16.msra.mxu0 0
        %550 = vmatpush.bf16.msra.mxu0 0
        %551 = vmatpush.bf16.msra.mxu0 0
        %552 = vmatpush.bf16.msra.mxu0 0
        %553 = vmatpush.bf16.msra.mxu0 %v528
        %554 = vmatmul.bf16.gmra.mxu0 %v522
        %v555 = vpop.f32.mrf.mxu0
        %v556 = vadd.f32 0.0, %v555
        %v557 = vpop.f32.mrf.mxu0
        %558 = vdwg.mxu0
        %559 = vmatpush.bf16.msra.mxu0 0
        %560 = vmatpush.bf16.msra.mxu0 0
        %561 = vmatpush.bf16.msra.mxu0 0
        %562 = vmatpush.bf16.msra.mxu0 0
        %563 = vmatpush.bf16.msra.mxu0 0
        %564 = vmatpush.bf16.msra.mxu0 0
        %565 = vmatpush.bf16.msra.mxu0 0
        %566 = vmatpush.bf16.msra.mxu0 %v531
        %567 = vmatmul.bf16.gmra.mxu0 %v522
        %v568 = vpop.f32.mrf.mxu0
        %v569 = vadd.f32 0.0, %v568
        %v570 = vpop.f32.mrf.mxu0
        %571 = vdwg.mxu0
        %v572 = vadd.f32 %v500, %v543
        %v573 = vadd.f32 %v501, %v556
        %v574 = vadd.f32 %v502, %v569
        %s575 = scalar_lea.vmem %s1, 16
        %v576 = vld [vmem:[%s575] sm:$0xf]
        %577 = vst [vmem:[#allocation1] ss:$4 sm:$0xff] %v305
        %v578 = vld.sshfl [vmem:[#allocation1] sm:$0xff pattern:$0x73625140]
        %v580 = vld.sshfl [vmem:[#allocation1 + $0x8] sm:$0xff pattern:$0x73625140]
        %v582 = vld.sshfl [vmem:[#allocation1 + $0x10] sm:$0xff pattern:$0x73625140]
        %584 = vrot.lane.b32.xlu0 %v578, 109
        %v585 = vpop.permute.xlu0 %584
        %586 = vrot.lane.b32.xlu0 %v580, 109
        %v587 = vpop.permute.xlu0 %586
        %588 = vrot.lane.b32.xlu0 %v582, 109
        %v589 = vpop.permute.xlu0 %588
        %vm590 = vcmask 891904
        %v591 = vsel %vm590, %v585, %v587
        %v592 = vsel %vm590, %v587, %v589
        %v594 = vsel %vm326, %v576, 0
        %v597 = vsel %vm330, %v591, 0
        %v600 = vsel %vm330, %v592, 0
        %v603 = vsel %vm330, %v589, 0
        %605 = vmatpush.bf16.msra.mxu0 0
        %606 = vmatpush.bf16.msra.mxu0 0
        %607 = vmatpush.bf16.msra.mxu0 0
        %608 = vmatpush.bf16.msra.mxu0 0
        %609 = vmatpush.bf16.msra.mxu0 0
        %610 = vmatpush.bf16.msra.mxu0 0
        %611 = vmatpush.bf16.msra.mxu0 0
        %612 = vmatpush.bf16.msra.mxu0 %v597
        %613 = vmatmul.bf16.gmra.mxu0 %v594
        %v614 = vpop.f32.mrf.mxu0
        %v615 = vadd.f32 0.0, %v614
        %v616 = vpop.f32.mrf.mxu0
        %617 = vdwg.mxu0
        %618 = vmatpush.bf16.msra.mxu0 0
        %619 = vmatpush.bf16.msra.mxu0 0
        %620 = vmatpush.bf16.msra.mxu0 0
        %621 = vmatpush.bf16.msra.mxu0 0
        %622 = vmatpush.bf16.msra.mxu0 0
        %623 = vmatpush.bf16.msra.mxu0 0
        %624 = vmatpush.bf16.msra.mxu0 0
        %625 = vmatpush.bf16.msra.mxu0 %v600
        %626 = vmatmul.bf16.gmra.mxu0 %v594
        %v627 = vpop.f32.mrf.mxu0
        %v628 = vadd.f32 0.0, %v627
        %v629 = vpop.f32.mrf.mxu0
        %630 = vdwg.mxu0
        %631 = vmatpush.bf16.msra.mxu0 0
        %632 = vmatpush.bf16.msra.mxu0 0
        %633 = vmatpush.bf16.msra.mxu0 0
        %634 = vmatpush.bf16.msra.mxu0 0
        %635 = vmatpush.bf16.msra.mxu0 0
        %636 = vmatpush.bf16.msra.mxu0 0
        %637 = vmatpush.bf16.msra.mxu0 0
        %638 = vmatpush.bf16.msra.mxu0 %v603
        %639 = vmatmul.bf16.gmra.mxu0 %v594
        %v640 = vpop.f32.mrf.mxu0
        %v641 = vadd.f32 0.0, %v640
        %v642 = vpop.f32.mrf.mxu0
        %643 = vdwg.mxu0
        %v644 = vadd.f32 %v572, %v615
        %v645 = vadd.f32 %v573, %v628
        %v646 = vadd.f32 %v574, %v641
        %s647 = scalar_lea.vmem %s1, 20
        %v648 = vld [vmem:[%s647] sm:$0xf]
        %649 = vst [vmem:[#allocation1] ss:$4 sm:$0xff] %v305
        %v650 = vld.sshfl [vmem:[#allocation1] sm:$0xff pattern:$0x73625140]
        %v652 = vld.sshfl [vmem:[#allocation1 + $0x8] sm:$0xff pattern:$0x73625140]
        %v654 = vld.sshfl [vmem:[#allocation1 + $0x10] sm:$0xff pattern:$0x73625140]
        %656 = vrot.lane.b32.xlu0 %v650, 108
        %v657 = vpop.permute.xlu0 %656
        %658 = vrot.lane.b32.xlu0 %v652, 108
        %v659 = vpop.permute.xlu0 %658
        %660 = vrot.lane.b32.xlu0 %v654, 108
        %v661 = vpop.permute.xlu0 %660
        %vm662 = vcmask 883712
        %v663 = vsel %vm662, %v657, %v659
        %v664 = vsel %vm662, %v659, %v661
        %v666 = vsel %vm326, %v648, 0
        %v669 = vsel %vm330, %v663, 0
        %v672 = vsel %vm330, %v664, 0
        %v675 = vsel %vm330, %v661, 0
        %677 = vmatpush.bf16.msra.mxu0 0
        %678 = vmatpush.bf16.msra.mxu0 0
        %679 = vmatpush.bf16.msra.mxu0 0
        %680 = vmatpush.bf16.msra.mxu0 0
        %681 = vmatpush.bf16.msra.mxu0 0
        %682 = vmatpush.bf16.msra.mxu0 0
        %683 = vmatpush.bf16.msra.mxu0 0
        %684 = vmatpush.bf16.msra.mxu0 %v669
        %685 = vmatmul.bf16.gmra.mxu0 %v666
        %v686 = vpop.f32.mrf.mxu0
        %v687 = vadd.f32 0.0, %v686
        %v688 = vpop.f32.mrf.mxu0
        %689 = vdwg.mxu0
        %690 = vmatpush.bf16.msra.mxu0 0
        %691 = vmatpush.bf16.msra.mxu0 0
        %692 = vmatpush.bf16.msra.mxu0 0
        %693 = vmatpush.bf16.msra.mxu0 0
        %694 = vmatpush.bf16.msra.mxu0 0
        %695 = vmatpush.bf16.msra.mxu0 0
        %696 = vmatpush.bf16.msra.mxu0 0
        %697 = vmatpush.bf16.msra.mxu0 %v672
        %698 = vmatmul.bf16.gmra.mxu0 %v666
        %v699 = vpop.f32.mrf.mxu0
        %v700 = vadd.f32 0.0, %v699
        %v701 = vpop.f32.mrf.mxu0
        %702 = vdwg.mxu0
        %703 = vmatpush.bf16.msra.mxu0 0
        %704 = vmatpush.bf16.msra.mxu0 0
        %705 = vmatpush.bf16.msra.mxu0 0
        %706 = vmatpush.bf16.msra.mxu0 0
        %707 = vmatpush.bf16.msra.mxu0 0
        %708 = vmatpush.bf16.msra.mxu0 0
        %709 = vmatpush.bf16.msra.mxu0 0
        %710 = vmatpush.bf16.msra.mxu0 %v675
        %711 = vmatmul.bf16.gmra.mxu0 %v666
        %v712 = vpop.f32.mrf.mxu0
        %v713 = vadd.f32 0.0, %v712
        %v714 = vpop.f32.mrf.mxu0
        %715 = vdwg.mxu0
        %v716 = vadd.f32 %v644, %v687
        %v717 = vadd.f32 %v645, %v700
        %v718 = vadd.f32 %v646, %v713
        %s719 = scalar_lea.vmem %s1, 24
        %v720 = vld [vmem:[%s719] sm:$0xf]
        %721 = vst [vmem:[#allocation1] ss:$4 sm:$0xff] %v305
        %v722 = vld.sshfl [vmem:[#allocation1] sm:$0xff pattern:$0x73625140]
        %v724 = vld.sshfl [vmem:[#allocation1 + $0x8] sm:$0xff pattern:$0x73625140]
        %v726 = vld.sshfl [vmem:[#allocation1 + $0x10] sm:$0xff pattern:$0x73625140]
        %728 = vrot.lane.b32.xlu0 %v722, 92
        %v729 = vpop.permute.xlu0 %728
        %730 = vrot.lane.b32.xlu0 %v724, 92
        %v731 = vpop.permute.xlu0 %730
        %732 = vrot.lane.b32.xlu0 %v726, 92
        %v733 = vpop.permute.xlu0 %732
        %vm734 = vcmask 752640
        %v735 = vsel %vm734, %v729, %v731
        %v736 = vsel %vm734, %v731, %v733
        %v738 = vsel %vm326, %v720, 0
        %v741 = vsel %vm330, %v735, 0
        %v744 = vsel %vm330, %v736, 0
        %v747 = vsel %vm330, %v733, 0
        %749 = vmatpush.bf16.msra.mxu0 0
        %750 = vmatpush.bf16.msra.mxu0 0
        %751 = vmatpush.bf16.msra.mxu0 0
        %752 = vmatpush.bf16.msra.mxu0 0
        %753 = vmatpush.bf16.msra.mxu0 0
        %754 = vmatpush.bf16.msra.mxu0 0
        %755 = vmatpush.bf16.msra.mxu0 0
        %756 = vmatpush.bf16.msra.mxu0 %v741
        %757 = vmatmul.bf16.gmra.mxu0 %v738
        %v758 = vpop.f32.mrf.mxu0
        %v759 = vadd.f32 0.0, %v758
        %v760 = vpop.f32.mrf.mxu0
        %761 = vdwg.mxu0
        %762 = vmatpush.bf16.msra.mxu0 0
        %763 = vmatpush.bf16.msra.mxu0 0
        %764 = vmatpush.bf16.msra.mxu0 0
        %765 = vmatpush.bf16.msra.mxu0 0
        %766 = vmatpush.bf16.msra.mxu0 0
        %767 = vmatpush.bf16.msra.mxu0 0
        %768 = vmatpush.bf16.msra.mxu0 0
        %769 = vmatpush.bf16.msra.mxu0 %v744
        %770 = vmatmul.bf16.gmra.mxu0 %v738
        %v771 = vpop.f32.mrf.mxu0
        %v772 = vadd.f32 0.0, %v771
        %v773 = vpop.f32.mrf.mxu0
        %774 = vdwg.mxu0
        %775 = vmatpush.bf16.msra.mxu0 0
        %776 = vmatpush.bf16.msra.mxu0 0
        %777 = vmatpush.bf16.msra.mxu0 0
        %778 = vmatpush.bf16.msra.mxu0 0
        %779 = vmatpush.bf16.msra.mxu0 0
        %780 = vmatpush.bf16.msra.mxu0 0
        %781 = vmatpush.bf16.msra.mxu0 0
        %782 = vmatpush.bf16.msra.mxu0 %v747
        %783 = vmatmul.bf16.gmra.mxu0 %v738
        %v784 = vpop.f32.mrf.mxu0
        %v785 = vadd.f32 0.0, %v784
        %v786 = vpop.f32.mrf.mxu0
        %787 = vdwg.mxu0
        %v788 = vadd.f32 %v716, %v759
        %v789 = vadd.f32 %v717, %v772
        %v790 = vadd.f32 %v718, %v785
        %s791 = scalar_lea.vmem %s1, 28
        %v792 = vld [vmem:[%s791] sm:$0xf]
        %793 = vst [vmem:[#allocation1] ss:$4 sm:$0xff] %v305
        %v794 = vld.sshfl [vmem:[#allocation1] sm:$0xff pattern:$0x73625140]
        %v796 = vld.sshfl [vmem:[#allocation1 + $0x8] sm:$0xff pattern:$0x73625140]
        %v798 = vld.sshfl [vmem:[#allocation1 + $0x10] sm:$0xff pattern:$0x73625140]
        %800 = vrot.lane.b32.xlu0 %v794, 91
        %v801 = vpop.permute.xlu0 %800
        %802 = vrot.lane.b32.xlu0 %v796, 91
        %v803 = vpop.permute.xlu0 %802
        %804 = vrot.lane.b32.xlu0 %v798, 91
        %v805 = vpop.permute.xlu0 %804
        %vm806 = vcmask 744448
        %v807 = vsel %vm806, %v801, %v803
        %v808 = vsel %vm806, %v803, %v805
        %v810 = vsel %vm326, %v792, 0
        %v813 = vsel %vm330, %v807, 0
        %v816 = vsel %vm330, %v808, 0
        %v819 = vsel %vm330, %v805, 0
        %821 = vmatpush.bf16.msra.mxu0 0
        %822 = vmatpush.bf16.msra.mxu0 0
        %823 = vmatpush.bf16.msra.mxu0 0
        %824 = vmatpush.bf16.msra.mxu0 0
        %825 = vmatpush.bf16.msra.mxu0 0
        %826 = vmatpush.bf16.msra.mxu0 0
        %827 = vmatpush.bf16.msra.mxu0 0
        %828 = vmatpush.bf16.msra.mxu0 %v813
        %829 = vmatmul.bf16.gmra.mxu0 %v810
        %v830 = vpop.f32.mrf.mxu0
        %v831 = vadd.f32 0.0, %v830
        %v832 = vpop.f32.mrf.mxu0
        %833 = vdwg.mxu0
        %834 = vmatpush.bf16.msra.mxu0 0
        %835 = vmatpush.bf16.msra.mxu0 0
        %836 = vmatpush.bf16.msra.mxu0 0
        %837 = vmatpush.bf16.msra.mxu0 0
        %838 = vmatpush.bf16.msra.mxu0 0
        %839 = vmatpush.bf16.msra.mxu0 0
        %840 = vmatpush.bf16.msra.mxu0 0
        %841 = vmatpush.bf16.msra.mxu0 %v816
        %842 = vmatmul.bf16.gmra.mxu0 %v810
        %v843 = vpop.f32.mrf.mxu0
        %v844 = vadd.f32 0.0, %v843
        %v845 = vpop.f32.mrf.mxu0
        %846 = vdwg.mxu0
        %847 = vmatpush.bf16.msra.mxu0 0
        %848 = vmatpush.bf16.msra.mxu0 0
        %849 = vmatpush.bf16.msra.mxu0 0
        %850 = vmatpush.bf16.msra.mxu0 0
        %851 = vmatpush.bf16.msra.mxu0 0
        %852 = vmatpush.bf16.msra.mxu0 0
        %853 = vmatpush.bf16.msra.mxu0 0
        %854 = vmatpush.bf16.msra.mxu0 %v819
        %855 = vmatmul.bf16.gmra.mxu0 %v810
        %v856 = vpop.f32.mrf.mxu0
        %v857 = vadd.f32 0.0, %v856
        %v858 = vpop.f32.mrf.mxu0
        %859 = vdwg.mxu0
        %v860 = vadd.f32 %v788, %v831
        %v861 = vadd.f32 %v789, %v844
        %v862 = vadd.f32 %v790, %v857
        %s863 = scalar_lea.vmem %s1, 32
        %v864 = vld [vmem:[%s863] sm:$0xf]
        %865 = vst [vmem:[#allocation1] ss:$4 sm:$0xff] %v305
        %v866 = vld.sshfl [vmem:[#allocation1] sm:$0xff pattern:$0x73625140]
        %v868 = vld.sshfl [vmem:[#allocation1 + $0x8] sm:$0xff pattern:$0x73625140]
        %v870 = vld.sshfl [vmem:[#allocation1 + $0x10] sm:$0xff pattern:$0x73625140]
        %872 = vrot.lane.b32.xlu0 %v866, 90
        %v873 = vpop.permute.xlu0 %872
        %874 = vrot.lane.b32.xlu0 %v868, 90
        %v875 = vpop.permute.xlu0 %874
        %876 = vrot.lane.b32.xlu0 %v870, 90
        %v877 = vpop.permute.xlu0 %876
        %vm878 = vcmask 736256
        %v879 = vsel %vm878, %v873, %v875
        %v880 = vsel %vm878, %v875, %v877
        %v882 = vsel %vm326, %v864, 0
        %v885 = vsel %vm330, %v879, 0
        %v888 = vsel %vm330, %v880, 0
        %v891 = vsel %vm330, %v877, 0
        %893 = vmatpush.bf16.msra.mxu0 0
        %894 = vmatpush.bf16.msra.mxu0 0
        %895 = vmatpush.bf16.msra.mxu0 0
        %896 = vmatpush.bf16.msra.mxu0 0
        %897 = vmatpush.bf16.msra.mxu0 0
        %898 = vmatpush.bf16.msra.mxu0 0
        %899 = vmatpush.bf16.msra.mxu0 0
        %900 = vmatpush.bf16.msra.mxu0 %v885
        %901 = vmatmul.bf16.gmra.mxu0 %v882
        %v902 = vpop.f32.mrf.mxu0
        %v903 = vadd.f32 0.0, %v902
        %v904 = vpop.f32.mrf.mxu0
        %905 = vdwg.mxu0
        %906 = vmatpush.bf16.msra.mxu0 0
        %907 = vmatpush.bf16.msra.mxu0 0
        %908 = vmatpush.bf16.msra.mxu0 0
        %909 = vmatpush.bf16.msra.mxu0 0
        %910 = vmatpush.bf16.msra.mxu0 0
        %911 = vmatpush.bf16.msra.mxu0 0
        %912 = vmatpush.bf16.msra.mxu0 0
        %913 = vmatpush.bf16.msra.mxu0 %v888
        %914 = vmatmul.bf16.gmra.mxu0 %v882
        %v915 = vpop.f32.mrf.mxu0
        %v916 = vadd.f32 0.0, %v915
        %v917 = vpop.f32.mrf.mxu0
        %918 = vdwg.mxu0
        %919 = vmatpush.bf16.msra.mxu0 0
        %920 = vmatpush.bf16.msra.mxu0 0
        %921 = vmatpush.bf16.msra.mxu0 0
        %922 = vmatpush.bf16.msra.mxu0 0
        %923 = vmatpush.bf16.msra.mxu0 0
        %924 = vmatpush.bf16.msra.mxu0 0
        %925 = vmatpush.bf16.msra.mxu0 0
        %926 = vmatpush.bf16.msra.mxu0 %v891
        %927 = vmatmul.bf16.gmra.mxu0 %v882
        %v928 = vpop.f32.mrf.mxu0
        %v929 = vadd.f32 0.0, %v928
        %v930 = vpop.f32.mrf.mxu0
        %931 = vdwg.mxu0
        %v932 = vadd.f32 %v860, %v903
        %v933 = vadd.f32 %v861, %v916
        %v934 = vadd.f32 %v862, %v929
        %v935 = vld [vmem:[%s2] sm:$0xff]
        %937 = vset.pattern.permute.xlu0 0
        %938 = vperm.xlu0 %937, %v935
        %v939 = vpop.permute.xlu0 %938
        %v941 = vadd.f32 %v932, %v939
        %v942 = vadd.f32 %v933, %v939
        %v943 = vadd.f32 %v934, %v939
        %v944 = vmax.f32 %v941, 0.0
        %v945 = vmax.f32 %v942, 0.0
        %v946 = vmax.f32 %v943, 0.0
        %v947 = vld [vmem:[%s5] sm:$0x7]
        %v949 = vperm.slane %v947, 0
        %v950 = vperm.slane %v947, 1
        %v951 = vperm.slane %v947, 2
        %v955 = vmul.f32 %v944, %v949
        %v956 = vmul.f32 %v945, %v950
        %v957 = vmul.f32 %v946, %v951
        %958 = vst [vmem:[#allocation2] sm:$0xff] 0
        %vm959 = vcmask 568320
        %960 = vst.msk [vmem:[#allocation2 + $0x8] sm:$0xf] %vm959, 0
        %v961 = vpack.c.bf16 %v956, %v955
        %v962 = vpack.c.bf16 %v957, %v957
        %965 = vrot.lane.b32.xlu0 %v961, 19
        %v966 = vpop.permute.xlu0 %965
        %967 = vrot.lane.b32.xlu0 %v962, 19
        %v968 = vpop.permute.xlu0 %967
        %v969 = vrot.slane %v966, 4
        %vm970 = vcmask 154624
        %v971 = vsel %vm970, %v969, %v966
        %v972 = vsel %vm970, %v969, %v968
        %vm975 = vcmask 1043608
        %vm976 = vcmask 1047556
        %vm977 = vmor %vm976, %vm975
        %978 = vst.msk [vmem:[#allocation2] sm:$0xff] %vm977, %v971
        %vm979 = vcmask 412672
        %980 = vst.msk [vmem:[#allocation2 + $0x8] sm:$0xf] %vm979, %v972
        %v981 = vld [vmem:[#allocation2] sm:$0xff]
        %v982 = vld [vmem:[#allocation2 + $0x8] sm:$0xf]
        %v983 = vld [vmem:[%s3] sm:$0xf]
        %s984 = scalar_lea.vmem %s3, 4
        %v985 = vld [vmem:[%s984] sm:$0xf]
        %v988 = vunpack.c.l.b16 %v981
        %v989 = vunpack.c.h.b16 %v981
        %v990 = vunpack.c.l.b16 %v982
        %v991 = vpack.c.b16 %v988, %v988
        %v992 = vpack.c.b16 %v989, %v989
        %v993 = vpack.c.b16 %v990, %v990
        %994 = vrot.lane.b32.xlu0 %v991, 127
        %v995 = vpop.permute.xlu0 %994
        %996 = vrot.lane.b32.xlu0 %v992, 127
        %v997 = vpop.permute.xlu0 %996
        %998 = vrot.lane.b32.xlu0 %v993, 127
        %v999 = vpop.permute.xlu0 %998
        %v1000 = vsel %vm323, %v995, %v997
        %v1001 = vsel %vm323, %v997, %v999
        %vm1002 = vcmask 64512
        %v1004 = vsel %vm1002, %v985, 0
        %vm1006 = vcmask 1043456
        %v1008 = vsel %vm1006, %v1000, 0
        %v1011 = vsel %vm1006, %v1001, 0
        %v1014 = vsel %vm1006, %v999, 0
        %1016 = vmatpush.bf16.msra.mxu0 0
        %1017 = vmatpush.bf16.msra.mxu0 0
        %1018 = vmatpush.bf16.msra.mxu0 0
        %1019 = vmatpush.bf16.msra.mxu0 0
        %1020 = vmatpush.bf16.msra.mxu0 0
        %1021 = vmatpush.bf16.msra.mxu0 0
        %1022 = vmatpush.bf16.msra.mxu0 0
        %1023 = vmatpush.bf16.msra.mxu0 %v1008
        %1024 = vmatmul.bf16.gmra.mxu0 %v1004
        %v1025 = vpop.f32.mrf.mxu0
        %v1026 = vadd.f32 0.0, %v1025
        %v1027 = vpop.f32.mrf.mxu0
        %1028 = vdwg.mxu0
        %1029 = vmatpush.bf16.msra.mxu0 0
        %1030 = vmatpush.bf16.msra.mxu0 0
        %1031 = vmatpush.bf16.msra.mxu0 0
        %1032 = vmatpush.bf16.msra.mxu0 0
        %1033 = vmatpush.bf16.msra.mxu0 0
        %1034 = vmatpush.bf16.msra.mxu0 0
        %1035 = vmatpush.bf16.msra.mxu0 0
        %1036 = vmatpush.bf16.msra.mxu0 %v1011
        %1037 = vmatmul.bf16.gmra.mxu0 %v1004
        %v1038 = vpop.f32.mrf.mxu0
        %v1039 = vadd.f32 0.0, %v1038
        %v1040 = vpop.f32.mrf.mxu0
        %1041 = vdwg.mxu0
        %1042 = vmatpush.bf16.msra.mxu0 0
        %1043 = vmatpush.bf16.msra.mxu0 0
        %1044 = vmatpush.bf16.msra.mxu0 0
        %1045 = vmatpush.bf16.msra.mxu0 0
        %1046 = vmatpush.bf16.msra.mxu0 0
        %1047 = vmatpush.bf16.msra.mxu0 0
        %1048 = vmatpush.bf16.msra.mxu0 0
        %1049 = vmatpush.bf16.msra.mxu0 %v1014
        %1050 = vmatmul.bf16.gmra.mxu0 %v1004
        %v1051 = vpop.f32.mrf.mxu0
        %v1052 = vadd.f32 0.0, %v1051
        %v1053 = vpop.f32.mrf.mxu0
        %1054 = vdwg.mxu0
        %v1056 = vsel %vm1002, %v983, 0
        %v1059 = vsel %vm1006, %v991, 0
        %v1062 = vsel %vm1006, %v992, 0
        %v1065 = vsel %vm1006, %v993, 0
        %1067 = vmatpush.bf16.msra.mxu0 0
        %1068 = vmatpush.bf16.msra.mxu0 0
        %1069 = vmatpush.bf16.msra.mxu0 0
        %1070 = vmatpush.bf16.msra.mxu0 0
        %1071 = vmatpush.bf16.msra.mxu0 0
        %1072 = vmatpush.bf16.msra.mxu0 0
        %1073 = vmatpush.bf16.msra.mxu0 0
        %1074 = vmatpush.bf16.msra.mxu0 %v1059
        %1075 = vmatmul.bf16.gmra.mxu0 %v1056
        %v1076 = vpop.f32.mrf.mxu0
        %v1077 = vadd.f32 %v1026, %v1076
        %v1078 = vpop.f32.mrf.mxu0
        %1079 = vdwg.mxu0
        %1080 = vmatpush.bf16.msra.mxu0 0
        %1081 = vmatpush.bf16.msra.mxu0 0
        %1082 = vmatpush.bf16.msra.mxu0 0
        %1083 = vmatpush.bf16.msra.mxu0 0
        %1084 = vmatpush.bf16.msra.mxu0 0
        %1085 = vmatpush.bf16.msra.mxu0 0
        %1086 = vmatpush.bf16.msra.mxu0 0
        %1087 = vmatpush.bf16.msra.mxu0 %v1062
        %1088 = vmatmul.bf16.gmra.mxu0 %v1056
        %v1089 = vpop.f32.mrf.mxu0
        %v1090 = vadd.f32 %v1039, %v1089
        %v1091 = vpop.f32.mrf.mxu0
        %1092 = vdwg.mxu0
        %1093 = vmatpush.bf16.msra.mxu0 0
        %1094 = vmatpush.bf16.msra.mxu0 0
        %1095 = vmatpush.bf16.msra.mxu0 0
        %1096 = vmatpush.bf16.msra.mxu0 0
        %1097 = vmatpush.bf16.msra.mxu0 0
        %1098 = vmatpush.bf16.msra.mxu0 0
        %1099 = vmatpush.bf16.msra.mxu0 0
        %1100 = vmatpush.bf16.msra.mxu0 %v1065
        %1101 = vmatmul.bf16.gmra.mxu0 %v1056
        %v1102 = vpop.f32.mrf.mxu0
        %v1103 = vadd.f32 %v1052, %v1102
        %v1104 = vpop.f32.mrf.mxu0
        %1105 = vdwg.mxu0
        %s1106 = scalar_lea.vmem %s3, 8
        %v1107 = vld [vmem:[%s1106] sm:$0xf]
        %1108 = vrot.lane.b32.xlu0 %v991, 126
        %v1109 = vpop.permute.xlu0 %1108
        %1110 = vrot.lane.b32.xlu0 %v992, 126
        %v1111 = vpop.permute.xlu0 %1110
        %1112 = vrot.lane.b32.xlu0 %v993, 126
        %v1113 = vpop.permute.xlu0 %1112
        %v1114 = vsel %vm446, %v1109, %v1111
        %v1115 = vsel %vm446, %v1111, %v1113
        %v1117 = vsel %vm1002, %v1107, 0
        %v1120 = vsel %vm1006, %v1114, 0
        %v1123 = vsel %vm1006, %v1115, 0
        %v1126 = vsel %vm1006, %v1113, 0
        %1128 = vmatpush.bf16.msra.mxu0 0
        %1129 = vmatpush.bf16.msra.mxu0 0
        %1130 = vmatpush.bf16.msra.mxu0 0
        %1131 = vmatpush.bf16.msra.mxu0 0
        %1132 = vmatpush.bf16.msra.mxu0 0
        %1133 = vmatpush.bf16.msra.mxu0 0
        %1134 = vmatpush.bf16.msra.mxu0 0
        %1135 = vmatpush.bf16.msra.mxu0 %v1120
        %1136 = vmatmul.bf16.gmra.mxu0 %v1117
        %v1137 = vpop.f32.mrf.mxu0
        %v1138 = vadd.f32 0.0, %v1137
        %v1139 = vpop.f32.mrf.mxu0
        %1140 = vdwg.mxu0
        %1141 = vmatpush.bf16.msra.mxu0 0
        %1142 = vmatpush.bf16.msra.mxu0 0
        %1143 = vmatpush.bf16.msra.mxu0 0
        %1144 = vmatpush.bf16.msra.mxu0 0
        %1145 = vmatpush.bf16.msra.mxu0 0
        %1146 = vmatpush.bf16.msra.mxu0 0
        %1147 = vmatpush.bf16.msra.mxu0 0
        %1148 = vmatpush.bf16.msra.mxu0 %v1123
        %1149 = vmatmul.bf16.gmra.mxu0 %v1117
        %v1150 = vpop.f32.mrf.mxu0
        %v1151 = vadd.f32 0.0, %v1150
        %v1152 = vpop.f32.mrf.mxu0
        %1153 = vdwg.mxu0
        %1154 = vmatpush.bf16.msra.mxu0 0
        %1155 = vmatpush.bf16.msra.mxu0 0
        %1156 = vmatpush.bf16.msra.mxu0 0
        %1157 = vmatpush.bf16.msra.mxu0 0
        %1158 = vmatpush.bf16.msra.mxu0 0
        %1159 = vmatpush.bf16.msra.mxu0 0
        %1160 = vmatpush.bf16.msra.mxu0 0
        %1161 = vmatpush.bf16.msra.mxu0 %v1126
        %1162 = vmatmul.bf16.gmra.mxu0 %v1117
        %v1163 = vpop.f32.mrf.mxu0
        %v1164 = vadd.f32 0.0, %v1163
        %v1165 = vpop.f32.mrf.mxu0
        %1166 = vdwg.mxu0
        %v1167 = vadd.f32 %v1077, %v1138
        %v1168 = vadd.f32 %v1090, %v1151
        %v1169 = vadd.f32 %v1103, %v1164
        %s1170 = scalar_lea.vmem %s3, 12
        %v1171 = vld [vmem:[%s1170] sm:$0xf]
        %1172 = vrot.lane.b32.xlu0 %v991, 110
        %v1173 = vpop.permute.xlu0 %1172
        %1174 = vrot.lane.b32.xlu0 %v992, 110
        %v1175 = vpop.permute.xlu0 %1174
        %1176 = vrot.lane.b32.xlu0 %v993, 110
        %v1177 = vpop.permute.xlu0 %1176
        %v1178 = vsel %vm518, %v1173, %v1175
        %v1179 = vsel %vm518, %v1175, %v1177
        %v1181 = vsel %vm1002, %v1171, 0
        %v1184 = vsel %vm1006, %v1178, 0
        %v1187 = vsel %vm1006, %v1179, 0
        %v1190 = vsel %vm1006, %v1177, 0
        %1192 = vmatpush.bf16.msra.mxu0 0
        %1193 = vmatpush.bf16.msra.mxu0 0
        %1194 = vmatpush.bf16.msra.mxu0 0
        %1195 = vmatpush.bf16.msra.mxu0 0
        %1196 = vmatpush.bf16.msra.mxu0 0
        %1197 = vmatpush.bf16.msra.mxu0 0
        %1198 = vmatpush.bf16.msra.mxu0 0
        %1199 = vmatpush.bf16.msra.mxu0 %v1184
        %1200 = vmatmul.bf16.gmra.mxu0 %v1181
        %v1201 = vpop.f32.mrf.mxu0
        %v1202 = vadd.f32 0.0, %v1201
        %v1203 = vpop.f32.mrf.mxu0
        %1204 = vdwg.mxu0
        %1205 = vmatpush.bf16.msra.mxu0 0
        %1206 = vmatpush.bf16.msra.mxu0 0
        %1207 = vmatpush.bf16.msra.mxu0 0
        %1208 = vmatpush.bf16.msra.mxu0 0
        %1209 = vmatpush.bf16.msra.mxu0 0
        %1210 = vmatpush.bf16.msra.mxu0 0
        %1211 = vmatpush.bf16.msra.mxu0 0
        %1212 = vmatpush.bf16.msra.mxu0 %v1187
        %1213 = vmatmul.bf16.gmra.mxu0 %v1181
        %v1214 = vpop.f32.mrf.mxu0
        %v1215 = vadd.f32 0.0, %v1214
        %v1216 = vpop.f32.mrf.mxu0
        %1217 = vdwg.mxu0
        %1218 = vmatpush.bf16.msra.mxu0 0
        %1219 = vmatpush.bf16.msra.mxu0 0
        %1220 = vmatpush.bf16.msra.mxu0 0
        %1221 = vmatpush.bf16.msra.mxu0 0
        %1222 = vmatpush.bf16.msra.mxu0 0
        %1223 = vmatpush.bf16.msra.mxu0 0
        %1224 = vmatpush.bf16.msra.mxu0 0
        %1225 = vmatpush.bf16.msra.mxu0 %v1190
        %1226 = vmatmul.bf16.gmra.mxu0 %v1181
        %v1227 = vpop.f32.mrf.mxu0
        %v1228 = vadd.f32 0.0, %v1227
        %v1229 = vpop.f32.mrf.mxu0
        %1230 = vdwg.mxu0
        %v1231 = vadd.f32 %v1167, %v1202
        %v1232 = vadd.f32 %v1168, %v1215
        %v1233 = vadd.f32 %v1169, %v1228
        %s1234 = scalar_lea.vmem %s3, 16
        %v1235 = vld [vmem:[%s1234] sm:$0xf]
        %1236 = vrot.lane.b32.xlu0 %v991, 109
        %v1237 = vpop.permute.xlu0 %1236
        %1238 = vrot.lane.b32.xlu0 %v992, 109
        %v1239 = vpop.permute.xlu0 %1238
        %1240 = vrot.lane.b32.xlu0 %v993, 109
        %v1241 = vpop.permute.xlu0 %1240
        %v1242 = vsel %vm590, %v1237, %v1239
        %v1243 = vsel %vm590, %v1239, %v1241
        %v1245 = vsel %vm1002, %v1235, 0
        %v1248 = vsel %vm1006, %v1242, 0
        %v1251 = vsel %vm1006, %v1243, 0
        %v1254 = vsel %vm1006, %v1241, 0
        %1256 = vmatpush.bf16.msra.mxu0 0
        %1257 = vmatpush.bf16.msra.mxu0 0
        %1258 = vmatpush.bf16.msra.mxu0 0
        %1259 = vmatpush.bf16.msra.mxu0 0
        %1260 = vmatpush.bf16.msra.mxu0 0
        %1261 = vmatpush.bf16.msra.mxu0 0
        %1262 = vmatpush.bf16.msra.mxu0 0
        %1263 = vmatpush.bf16.msra.mxu0 %v1248
        %1264 = vmatmul.bf16.gmra.mxu0 %v1245
        %v1265 = vpop.f32.mrf.mxu0
        %v1266 = vadd.f32 0.0, %v1265
        %v1267 = vpop.f32.mrf.mxu0
        %1268 = vdwg.mxu0
        %1269 = vmatpush.bf16.msra.mxu0 0
        %1270 = vmatpush.bf16.msra.mxu0 0
        %1271 = vmatpush.bf16.msra.mxu0 0
        %1272 = vmatpush.bf16.msra.mxu0 0
        %1273 = vmatpush.bf16.msra.mxu0 0
        %1274 = vmatpush.bf16.msra.mxu0 0
        %1275 = vmatpush.bf16.msra.mxu0 0
        %1276 = vmatpush.bf16.msra.mxu0 %v1251
        %1277 = vmatmul.bf16.gmra.mxu0 %v1245
        %v1278 = vpop.f32.mrf.mxu0
        %v1279 = vadd.f32 0.0, %v1278
        %v1280 = vpop.f32.mrf.mxu0
        %1281 = vdwg.mxu0
        %1282 = vmatpush.bf16.msra.mxu0 0
        %1283 = vmatpush.bf16.msra.mxu0 0
        %1284 = vmatpush.bf16.msra.mxu0 0
        %1285 = vmatpush.bf16.msra.mxu0 0
        %1286 = vmatpush.bf16.msra.mxu0 0
        %1287 = vmatpush.bf16.msra.mxu0 0
        %1288 = vmatpush.bf16.msra.mxu0 0
        %1289 = vmatpush.bf16.msra.mxu0 %v1254
        %1290 = vmatmul.bf16.gmra.mxu0 %v1245
        %v1291 = vpop.f32.mrf.mxu0
        %v1292 = vadd.f32 0.0, %v1291
        %v1293 = vpop.f32.mrf.mxu0
        %1294 = vdwg.mxu0
        %v1295 = vadd.f32 %v1231, %v1266
        %v1296 = vadd.f32 %v1232, %v1279
        %v1297 = vadd.f32 %v1233, %v1292
        %s1298 = scalar_lea.vmem %s3, 20
        %v1299 = vld [vmem:[%s1298] sm:$0xf]
        %1300 = vrot.lane.b32.xlu0 %v991, 108
        %v1301 = vpop.permute.xlu0 %1300
        %1302 = vrot.lane.b32.xlu0 %v992, 108
        %v1303 = vpop.permute.xlu0 %1302
        %1304 = vrot.lane.b32.xlu0 %v993, 108
        %v1305 = vpop.permute.xlu0 %1304
        %v1306 = vsel %vm662, %v1301, %v1303
        %v1307 = vsel %vm662, %v1303, %v1305
        %v1309 = vsel %vm1002, %v1299, 0
        %v1312 = vsel %vm1006, %v1306, 0
        %v1315 = vsel %vm1006, %v1307, 0
        %v1318 = vsel %vm1006, %v1305, 0
        %1320 = vmatpush.bf16.msra.mxu0 0
        %1321 = vmatpush.bf16.msra.mxu0 0
        %1322 = vmatpush.bf16.msra.mxu0 0
        %1323 = vmatpush.bf16.msra.mxu0 0
        %1324 = vmatpush.bf16.msra.mxu0 0
        %1325 = vmatpush.bf16.msra.mxu0 0
        %1326 = vmatpush.bf16.msra.mxu0 0
        %1327 = vmatpush.bf16.msra.mxu0 %v1312
        %1328 = vmatmul.bf16.gmra.mxu0 %v1309
        %v1329 = vpop.f32.mrf.mxu0
        %v1330 = vadd.f32 0.0, %v1329
        %v1331 = vpop.f32.mrf.mxu0
        %1332 = vdwg.mxu0
        %1333 = vmatpush.bf16.msra.mxu0 0
        %1334 = vmatpush.bf16.msra.mxu0 0
        %1335 = vmatpush.bf16.msra.mxu0 0
        %1336 = vmatpush.bf16.msra.mxu0 0
        %1337 = vmatpush.bf16.msra.mxu0 0
        %1338 = vmatpush.bf16.msra.mxu0 0
        %1339 = vmatpush.bf16.msra.mxu0 0
        %1340 = vmatpush.bf16.msra.mxu0 %v1315
        %1341 = vmatmul.bf16.gmra.mxu0 %v1309
        %v1342 = vpop.f32.mrf.mxu0
        %v1343 = vadd.f32 0.0, %v1342
        %v1344 = vpop.f32.mrf.mxu0
        %1345 = vdwg.mxu0
        %1346 = vmatpush.bf16.msra.mxu0 0
        %1347 = vmatpush.bf16.msra.mxu0 0
        %1348 = vmatpush.bf16.msra.mxu0 0
        %1349 = vmatpush.bf16.msra.mxu0 0
        %1350 = vmatpush.bf16.msra.mxu0 0
        %1351 = vmatpush.bf16.msra.mxu0 0
        %1352 = vmatpush.bf16.msra.mxu0 0
        %1353 = vmatpush.bf16.msra.mxu0 %v1318
        %1354 = vmatmul.bf16.gmra.mxu0 %v1309
        %v1355 = vpop.f32.mrf.mxu0
        %v1356 = vadd.f32 0.0, %v1355
        %v1357 = vpop.f32.mrf.mxu0
        %1358 = vdwg.mxu0
        %v1359 = vadd.f32 %v1295, %v1330
        %v1360 = vadd.f32 %v1296, %v1343
        %v1361 = vadd.f32 %v1297, %v1356
        %s1362 = scalar_lea.vmem %s3, 24
        %v1363 = vld [vmem:[%s1362] sm:$0xf]
        %1364 = vrot.lane.b32.xlu0 %v991, 92
        %v1365 = vpop.permute.xlu0 %1364
        %1366 = vrot.lane.b32.xlu0 %v992, 92
        %v1367 = vpop.permute.xlu0 %1366
        %1368 = vrot.lane.b32.xlu0 %v993, 92
        %v1369 = vpop.permute.xlu0 %1368
        %v1370 = vsel %vm734, %v1365, %v1367
        %v1371 = vsel %vm734, %v1367, %v1369
        %v1373 = vsel %vm1002, %v1363, 0
        %v1376 = vsel %vm1006, %v1370, 0
        %v1379 = vsel %vm1006, %v1371, 0
        %v1382 = vsel %vm1006, %v1369, 0
        %1384 = vmatpush.bf16.msra.mxu0 0
        %1385 = vmatpush.bf16.msra.mxu0 0
        %1386 = vmatpush.bf16.msra.mxu0 0
        %1387 = vmatpush.bf16.msra.mxu0 0
        %1388 = vmatpush.bf16.msra.mxu0 0
        %1389 = vmatpush.bf16.msra.mxu0 0
        %1390 = vmatpush.bf16.msra.mxu0 0
        %1391 = vmatpush.bf16.msra.mxu0 %v1376
        %1392 = vmatmul.bf16.gmra.mxu0 %v1373
        %v1393 = vpop.f32.mrf.mxu0
        %v1394 = vadd.f32 0.0, %v1393
        %v1395 = vpop.f32.mrf.mxu0
        %1396 = vdwg.mxu0
        %1397 = vmatpush.bf16.msra.mxu0 0
        %1398 = vmatpush.bf16.msra.mxu0 0
        %1399 = vmatpush.bf16.msra.mxu0 0
        %1400 = vmatpush.bf16.msra.mxu0 0
        %1401 = vmatpush.bf16.msra.mxu0 0
        %1402 = vmatpush.bf16.msra.mxu0 0
        %1403 = vmatpush.bf16.msra.mxu0 0
        %1404 = vmatpush.bf16.msra.mxu0 %v1379
        %1405 = vmatmul.bf16.gmra.mxu0 %v1373
        %v1406 = vpop.f32.mrf.mxu0
        %v1407 = vadd.f32 0.0, %v1406
        %v1408 = vpop.f32.mrf.mxu0
        %1409 = vdwg.mxu0
        %1410 = vmatpush.bf16.msra.mxu0 0
        %1411 = vmatpush.bf16.msra.mxu0 0
        %1412 = vmatpush.bf16.msra.mxu0 0
        %1413 = vmatpush.bf16.msra.mxu0 0
        %1414 = vmatpush.bf16.msra.mxu0 0
        %1415 = vmatpush.bf16.msra.mxu0 0
        %1416 = vmatpush.bf16.msra.mxu0 0
        %1417 = vmatpush.bf16.msra.mxu0 %v1382
        %1418 = vmatmul.bf16.gmra.mxu0 %v1373
        %v1419 = vpop.f32.mrf.mxu0
        %v1420 = vadd.f32 0.0, %v1419
        %v1421 = vpop.f32.mrf.mxu0
        %1422 = vdwg.mxu0
        %v1423 = vadd.f32 %v1359, %v1394
        %v1424 = vadd.f32 %v1360, %v1407
        %v1425 = vadd.f32 %v1361, %v1420
        %s1426 = scalar_lea.vmem %s3, 28
        %v1427 = vld [vmem:[%s1426] sm:$0xf]
        %1428 = vrot.lane.b32.xlu0 %v991, 91
        %v1429 = vpop.permute.xlu0 %1428
        %1430 = vrot.lane.b32.xlu0 %v992, 91
        %v1431 = vpop.permute.xlu0 %1430
        %1432 = vrot.lane.b32.xlu0 %v993, 91
        %v1433 = vpop.permute.xlu0 %1432
        %v1434 = vsel %vm806, %v1429, %v1431
        %v1435 = vsel %vm806, %v1431, %v1433
        %v1437 = vsel %vm1002, %v1427, 0
        %v1440 = vsel %vm1006, %v1434, 0
        %v1443 = vsel %vm1006, %v1435, 0
        %v1446 = vsel %vm1006, %v1433, 0
        %1448 = vmatpush.bf16.msra.mxu0 0
        %1449 = vmatpush.bf16.msra.mxu0 0
        %1450 = vmatpush.bf16.msra.mxu0 0
        %1451 = vmatpush.bf16.msra.mxu0 0
        %1452 = vmatpush.bf16.msra.mxu0 0
        %1453 = vmatpush.bf16.msra.mxu0 0
        %1454 = vmatpush.bf16.msra.mxu0 0
        %1455 = vmatpush.bf16.msra.mxu0 %v1440
        %1456 = vmatmul.bf16.gmra.mxu0 %v1437
        %v1457 = vpop.f32.mrf.mxu0
        %v1458 = vadd.f32 0.0, %v1457
        %v1459 = vpop.f32.mrf.mxu0
        %1460 = vdwg.mxu0
        %1461 = vmatpush.bf16.msra.mxu0 0
        %1462 = vmatpush.bf16.msra.mxu0 0
        %1463 = vmatpush.bf16.msra.mxu0 0
        %1464 = vmatpush.bf16.msra.mxu0 0
        %1465 = vmatpush.bf16.msra.mxu0 0
        %1466 = vmatpush.bf16.msra.mxu0 0
        %1467 = vmatpush.bf16.msra.mxu0 0
        %1468 = vmatpush.bf16.msra.mxu0 %v1443
        %1469 = vmatmul.bf16.gmra.mxu0 %v1437
        %v1470 = vpop.f32.mrf.mxu0
        %v1471 = vadd.f32 0.0, %v1470
        %v1472 = vpop.f32.mrf.mxu0
        %1473 = vdwg.mxu0
        %1474 = vmatpush.bf16.msra.mxu0 0
        %1475 = vmatpush.bf16.msra.mxu0 0
        %1476 = vmatpush.bf16.msra.mxu0 0
        %1477 = vmatpush.bf16.msra.mxu0 0
        %1478 = vmatpush.bf16.msra.mxu0 0
        %1479 = vmatpush.bf16.msra.mxu0 0
        %1480 = vmatpush.bf16.msra.mxu0 0
        %1481 = vmatpush.bf16.msra.mxu0 %v1446
        %1482 = vmatmul.bf16.gmra.mxu0 %v1437
        %v1483 = vpop.f32.mrf.mxu0
        %v1484 = vadd.f32 0.0, %v1483
        %v1485 = vpop.f32.mrf.mxu0
        %1486 = vdwg.mxu0
        %v1487 = vadd.f32 %v1423, %v1458
        %v1488 = vadd.f32 %v1424, %v1471
        %v1489 = vadd.f32 %v1425, %v1484
        %s1490 = scalar_lea.vmem %s3, 32
        %v1491 = vld [vmem:[%s1490] sm:$0xf]
        %1492 = vrot.lane.b32.xlu0 %v991, 90
        %v1493 = vpop.permute.xlu0 %1492
        %1494 = vrot.lane.b32.xlu0 %v992, 90
        %v1495 = vpop.permute.xlu0 %1494
        %1496 = vrot.lane.b32.xlu0 %v993, 90
        %v1497 = vpop.permute.xlu0 %1496
        %v1498 = vsel %vm878, %v1493, %v1495
        %v1499 = vsel %vm878, %v1495, %v1497
        %v1501 = vsel %vm1002, %v1491, 0
        %v1504 = vsel %vm1006, %v1498, 0
        %v1507 = vsel %vm1006, %v1499, 0
        %v1510 = vsel %vm1006, %v1497, 0
        %1512 = vmatpush.bf16.msra.mxu0 0
        %1513 = vmatpush.bf16.msra.mxu0 0
        %1514 = vmatpush.bf16.msra.mxu0 0
        %1515 = vmatpush.bf16.msra.mxu0 0
        %1516 = vmatpush.bf16.msra.mxu0 0
        %1517 = vmatpush.bf16.msra.mxu0 0
        %1518 = vmatpush.bf16.msra.mxu0 0
        %1519 = vmatpush.bf16.msra.mxu0 %v1504
        %1520 = vmatmul.bf16.gmra.mxu0 %v1501
        %v1521 = vpop.f32.mrf.mxu0
        %v1522 = vadd.f32 0.0, %v1521
        %v1523 = vpop.f32.mrf.mxu0
        %1524 = vdwg.mxu0
        %1525 = vmatpush.bf16.msra.mxu0 0
        %1526 = vmatpush.bf16.msra.mxu0 0
        %1527 = vmatpush.bf16.msra.mxu0 0
        %1528 = vmatpush.bf16.msra.mxu0 0
        %1529 = vmatpush.bf16.msra.mxu0 0
        %1530 = vmatpush.bf16.msra.mxu0 0
        %1531 = vmatpush.bf16.msra.mxu0 0
        %1532 = vmatpush.bf16.msra.mxu0 %v1507
        %1533 = vmatmul.bf16.gmra.mxu0 %v1501
        %v1534 = vpop.f32.mrf.mxu0
        %v1535 = vadd.f32 0.0, %v1534
        %v1536 = vpop.f32.mrf.mxu0
        %1537 = vdwg.mxu0
        %1538 = vmatpush.bf16.msra.mxu0 0
        %1539 = vmatpush.bf16.msra.mxu0 0
        %1540 = vmatpush.bf16.msra.mxu0 0
        %1541 = vmatpush.bf16.msra.mxu0 0
        %1542 = vmatpush.bf16.msra.mxu0 0
        %1543 = vmatpush.bf16.msra.mxu0 0
        %1544 = vmatpush.bf16.msra.mxu0 0
        %1545 = vmatpush.bf16.msra.mxu0 %v1510
        %1546 = vmatmul.bf16.gmra.mxu0 %v1501
        %v1547 = vpop.f32.mrf.mxu0
        %v1548 = vadd.f32 0.0, %v1547
        %v1549 = vpop.f32.mrf.mxu0
        %1550 = vdwg.mxu0
        %v1551 = vadd.f32 %v1487, %v1522
        %v1552 = vadd.f32 %v1488, %v1535
        %v1553 = vadd.f32 %v1489, %v1548
        %v1554 = vld [vmem:[%s4] sm:$0xff]
        %1556 = vset.pattern.permute.xlu0 0
        %1557 = vperm.xlu0 %1556, %v1554
        %v1558 = vpop.permute.xlu0 %1557
        %v1560 = vadd.f32 %v1551, %v1558
        %v1561 = vadd.f32 %v1552, %v1558
        %v1562 = vadd.f32 %v1553, %v1558
        %v1563 = vld [vmem:[%s6] sm:$0xf]
        %1564 = vst [vmem:[#allocation1] ss:$4 sm:$0xff] %v305
        %v1565 = vld.sshfl [vmem:[#allocation1] sm:$0xff pattern:$0x73625140]
        %v1567 = vld.sshfl [vmem:[#allocation1 + $0x8] sm:$0xff pattern:$0x73625140]
        %v1569 = vld.sshfl [vmem:[#allocation1 + $0x10] sm:$0xff pattern:$0x73625140]
        %1571 = vrot.lane.b32.xlu0 %v1565, 109
        %v1572 = vpop.permute.xlu0 %1571
        %1573 = vrot.lane.b32.xlu0 %v1567, 109
        %v1574 = vpop.permute.xlu0 %1573
        %1575 = vrot.lane.b32.xlu0 %v1569, 109
        %v1576 = vpop.permute.xlu0 %1575
        %v1577 = vsel %vm590, %v1572, %v1574
        %v1578 = vsel %vm590, %v1574, %v1576
        %v1580 = vsel %vm326, %v1563, 0
        %v1583 = vsel %vm330, %v1577, 0
        %v1586 = vsel %vm330, %v1578, 0
        %v1589 = vsel %vm330, %v1576, 0
        %1591 = vmatpush.bf16.msra.mxu0 0
        %1592 = vmatpush.bf16.msra.mxu0 0
        %1593 = vmatpush.bf16.msra.mxu0 0
        %1594 = vmatpush.bf16.msra.mxu0 0
        %1595 = vmatpush.bf16.msra.mxu0 0
        %1596 = vmatpush.bf16.msra.mxu0 0
        %1597 = vmatpush.bf16.msra.mxu0 0
        %1598 = vmatpush.bf16.msra.mxu0 %v1583
        %1599 = vmatmul.bf16.gmra.mxu0 %v1580
        %v1600 = vpop.f32.mrf.mxu0
        %v1601 = vadd.f32 0.0, %v1600
        %v1602 = vpop.f32.mrf.mxu0
        %1603 = vdwg.mxu0
        %1604 = vmatpush.bf16.msra.mxu0 0
        %1605 = vmatpush.bf16.msra.mxu0 0
        %1606 = vmatpush.bf16.msra.mxu0 0
        %1607 = vmatpush.bf16.msra.mxu0 0
        %1608 = vmatpush.bf16.msra.mxu0 0
        %1609 = vmatpush.bf16.msra.mxu0 0
        %1610 = vmatpush.bf16.msra.mxu0 0
        %1611 = vmatpush.bf16.msra.mxu0 %v1586
        %1612 = vmatmul.bf16.gmra.mxu0 %v1580
        %v1613 = vpop.f32.mrf.mxu0
        %v1614 = vadd.f32 0.0, %v1613
        %v1615 = vpop.f32.mrf.mxu0
        %1616 = vdwg.mxu0
        %1617 = vmatpush.bf16.msra.mxu0 0
        %1618 = vmatpush.bf16.msra.mxu0 0
        %1619 = vmatpush.bf16.msra.mxu0 0
        %1620 = vmatpush.bf16.msra.mxu0 0
        %1621 = vmatpush.bf16.msra.mxu0 0
        %1622 = vmatpush.bf16.msra.mxu0 0
        %1623 = vmatpush.bf16.msra.mxu0 0
        %1624 = vmatpush.bf16.msra.mxu0 %v1589
        %1625 = vmatmul.bf16.gmra.mxu0 %v1580
        %v1626 = vpop.f32.mrf.mxu0
        %v1627 = vadd.f32 0.0, %v1626
        %v1628 = vpop.f32.mrf.mxu0
        %1629 = vdwg.mxu0
        %v1630 = vadd.f32 %v1560, %v1601
        %v1631 = vadd.f32 %v1561, %v1614
        %v1632 = vadd.f32 %v1562, %v1627
        %v1633 = vld [vmem:[%s7] sm:$0xff]
        %1635 = vset.pattern.permute.xlu0 0
        %1636 = vperm.xlu0 %1635, %v1633
        %v1637 = vpop.permute.xlu0 %1636
        %v1639 = vadd.f32 %v1630, %v1637
        %v1640 = vadd.f32 %v1631, %v1637
        %v1641 = vadd.f32 %v1632, %v1637
        %v1642 = vmax.f32 %v1639, 0.0
        %v1643 = vmax.f32 %v1640, 0.0
        %v1644 = vmax.f32 %v1641, 0.0
        %1645 = vst [vmem:[%s298] sm:$0xff] %v1642
        %1646 = vst [vmem:[%s298 + $0x8] sm:$0xff] %v1643
        %vm1647 = vcmask 261120
        %1648 = vst.msk [vmem:[%s298 + $0x10] sm:$0xff] %vm1647, %v1644
        %s1649 = sand.u32 %s203, 1
        %s1650 = scalar_lea.sflag [#allocation4], %s1649
        %s1651 = sand.u32 %s203, 1
        %s1652 = smul.addr %s1651, 24
        %s1653 = scalar_lea.vmem [#allocation3], %s1652
        // Predicated region
        $region53: #{tpu_custom_call.1} parent=51 // pred_check
          %p1654 = pneg %p213
        $region54: #{tpu_custom_call.1} parent=51 // pred_check_branch
          %1656 = sbr.rel (%p1654) target = $region56
        $region55: #{tpu_custom_call.1} parent=51 // pred_region
          %1658 = vsyncadd %s1650, 0
          %s1659 = smul.addr %s22, 3
          %s1660 = smul.addr %s1659, 8
          %s1661 = scalar_lea.hbm %s8, %s1660
          %s1663 = sshll.u32 %s1653, 4
          %s1664 = int_to_ptr.vmem [resolvable:$true] %s1663
          %s1665 = sshll.u32 %s1661, 4
          %s1666 = int_to_ptr.hbm [resolvable:$true] %s1665
          %1668 = dma.vmem_to_hbm [thread:$0]  %s1664, 384, %s1666, %s1650
        $region56: #{tpu_custom_call.1} parent=51 // pred_fallthru
          _
      $region52: #{tpu_custom_call.1} parent=5 // pred_fallthru
        _
      %p1669 = scmp.le.s32.totalorder 2, %s17
      // Predicated region
      $region57: #{tpu_custom_call.1} parent=5 // pred_check
        %p1670 = pneg %p1669
      $region58: #{tpu_custom_call.1} parent=5 // pred_check_branch
        %1672 = sbr.rel (%p1670) target = $region60
      $region59: #{tpu_custom_call.1} parent=5 // pred_region
        %s1673 = ssub.s32 %s17, 2
        // Predicated region
        $region61: #{tpu_custom_call.1} parent=59 // pred_check
          %p1674 = pneg %p219
        $region62: #{tpu_custom_call.1} parent=59 // pred_check_branch
          %1676 = sbr.rel (%p1674) target = $region64
        $region63: #{tpu_custom_call.1} parent=59 // pred_region
          %s1677 = sand.u32 %s204, 1
          %s1678 = scalar_lea.sflag [#allocation4], %s1677
          %s1679 = sand.u32 %s204, 1
          %s1680 = smul.addr %s1679, 24
          %s1681 = scalar_lea.vmem [#allocation3], %s1680
          %1683 = dma.done %s1678, 384
        $region64: #{tpu_custom_call.1} parent=59 // pred_fallthru
          _
      $region60: #{tpu_custom_call.1} parent=5 // pred_fallthru
        _
    $region6: #{tpu_custom_call.1} parent=1 // loop_footer
      %s21 = sadd.s32 1, %s17
    $region7: #{tpu_custom_call.1} parent=1 // loop_footer_branch
      %16 = sbr.rel target = $region3
    $region8: #{tpu_custom_call.1} parent=1 // loop_exit
      _
    %1684 = vsyncpa [#allocation4], 1
    %s1685 = scalar_lea.sflag [#allocation4], 1
    %1686 = vsyncpa %s1685, 1

</llo_original>
